<compile_context>
chip_gen: v7x
topology: tpu7x:2x2x1
jax: 0.10.0
libtpu: 0.0.40
codegen_flags: <defaults>
</compile_context>

<pallas_src>
import numpy as np
import jax
import jax.numpy as jnp
from jax.experimental import pallas as pl
from jax.experimental.pallas import tpu as pltpu

NUM_FREQ = 6
IN_DIM = 2                                    # raw coordinate dim
ENC_DIM = IN_DIM + 2 * IN_DIM * NUM_FREQ      # 26 (positional-encoded width)
ENC_PACK = 32                                 # padded K for the fused layer-1 dot
HIDDEN = 64
HEAD_F1 = IN_DIM * 2                          # 4 columns -> f1
LN_EPS = 1e-5


def _round_up(n, m):
    return ((n + m - 1) // m) * m


def _cdiv(a, b):
    return (a + b - 1) // b


def _layernorm(h, gamma, beta):
    # Single-pass statistics: var = E[x^2] - E[x]^2, clamped at 0 (review item).
    mu = jnp.mean(h, axis=-1, keepdims=True)
    ms = jnp.mean(h * h, axis=-1, keepdims=True)
    var = jnp.maximum(ms - mu * mu, 0.0)
    return (h - mu) * jax.lax.rsqrt(var + LN_EPS) * gamma + beta


def _silu(h):
    return h * jax.nn.sigmoid(h)


def make_cgn_kernel(dim_z, matmul_dtype):
    g_width = HEAD_F1 * dim_z

    def cgn_kernel(x_ref, sel_ref, off_ref, w1_ref, vecs_ref, w2_ref,
                   w3_ref, b3_ref, csum_ref, cbrd_ref, f1_ref, g1_ref):
        x = x_ref[...]                                            # (TB, 2) f32

        # --- positional encoding: one tiny selector dot + one sin pass -------
        # phase lanes: [x0, x1, x0*f, x0*f+pi/2, x1*f, x1*f+pi/2, 0...]
        # (frequencies are folded into sel; cos = sin(. + pi/2)).
        phase = jnp.dot(x, sel_ref[...],
                        preferred_element_type=jnp.float32) + off_ref[...]
        lane = jax.lax.broadcasted_iota(jnp.int32, phase.shape, 1)
        enc = jnp.where(lane < IN_DIM, phase, jnp.sin(phase))     # (TB, 32)

        vecs = vecs_ref[...]                                      # (8, HIDDEN)
        b1, ln1g, ln1b = vecs[0:1], vecs[1:2], vecs[2:3]
        b2, ln2g, ln2b = vecs[3:4], vecs[4:5], vecs[5:6]

        # --- MLP (bf16 operands by default, f32 accumulation) ---------------
        h = jnp.dot(enc.astype(matmul_dtype), w1_ref[...],
                    preferred_element_type=jnp.float32) + b1
        h = _silu(_layernorm(h, ln1g, ln1b))
        h = jnp.dot(h.astype(matmul_dtype), w2_ref[...],
                    preferred_element_type=jnp.float32) + b2
        h = _silu(_layernorm(h, ln2g, ln2b))

        # --- merged layer-3 head: lanes [0:g_width]=g, [g_width:+4]=f --------
        out3 = jnp.dot(h.astype(matmul_dtype), w3_ref[...],
                       preferred_element_type=jnp.float32) + b3_ref[...]
        g = out3[:, :g_width]
        f1_ref[...] = out3[:, g_width:g_width + HEAD_F1]

        # --- per-chunk softmax without lane reshapes -------------------------
        # Row-max stabilization (same constant within each chunk -> identical
        # softmax); per-chunk exp-sums via a 0/1 indicator matmul; broadcast
        # of the 4 inverse sums back to 128 lanes via its transpose (MXU).
        m = jnp.max(g, axis=-1, keepdims=True)
        e = jnp.exp(g - m)                                        # (TB, g_width) f32
        csum = jnp.dot(e, csum_ref[...],
                       preferred_element_type=jnp.float32)        # (TB, 4)
        inv = pl.reciprocal(jnp.maximum(csum, 1e-30), approx=False)
        g1_ref[...] = e * jnp.dot(inv, cbrd_ref[...],
                                  preferred_element_type=jnp.float32)

    return cgn_kernel


def init_cgn_params(key, dim_z):
    out_dim = HEAD_F1 + HEAD_F1 * dim_z
    ks = jax.random.split(key, 8)

    def linear(kw, kb, fan_in, fan_out):
        bound = 1.0 / np.sqrt(fan_in)
        w = jax.random.uniform(kw, (fan_in, fan_out), jnp.float32, -bound, bound)
        b = jax.random.uniform(kb, (1, fan_out), jnp.float32, -bound, bound)
        return w, b

    w1, b1 = linear(ks[0], ks[1], ENC_DIM, HIDDEN)
    w2, b2 = linear(ks[2], ks[3], HIDDEN, HIDDEN)
    w3, b3 = linear(ks[4], ks[5], HIDDEN, out_dim)
    return dict(
        w1=w1, b1=b1,
        ln1g=jnp.ones((1, HIDDEN), jnp.float32),
        ln1b=jnp.zeros((1, HIDDEN), jnp.float32),
        w2=w2, b2=b2,
        ln2g=jnp.ones((1, HIDDEN), jnp.float32),
        ln2b=jnp.zeros((1, HIDDEN), jnp.float32),
        w3=w3, b3=b3,
        f2=(1.0 / dim_z ** 0.5) * jax.random.uniform(ks[6], (dim_z, 1), jnp.float32),
        g2=(1.0 / dim_z) * jax.random.uniform(ks[7], (dim_z, dim_z), jnp.float32),
    )


def pack_cgn_params(params, dim_z, matmul_dtype=jnp.bfloat16):
    """One-time layout plumbing (outside the kernel)."""
    g_width = HEAD_F1 * dim_z
    freqs = (2.0 ** np.arange(NUM_FREQ)) * np.pi

    # Selector (2, 32) with frequencies folded in, and the pi/2 phase offsets.
    sel = np.zeros((IN_DIM, ENC_PACK), np.float32)
    off = np.zeros((1, ENC_PACK), np.float32)
    sel[0, 0] = 1.0
    sel[1, 1] = 1.0
    sel[0, 2:2 + NUM_FREQ] = freqs                    # sin(x0*f)
    sel[0, 2 + NUM_FREQ:2 + 2 * NUM_FREQ] = freqs     # cos(x0*f)
    sel[1, 2 + 2 * NUM_FREQ:2 + 3 * NUM_FREQ] = freqs # sin(x1*f)
    sel[1, 2 + 3 * NUM_FREQ:2 + 4 * NUM_FREQ] = freqs # cos(x1*f)
    off[0, 2 + NUM_FREQ:2 + 2 * NUM_FREQ] = np.pi / 2
    off[0, 2 + 3 * NUM_FREQ:2 + 4 * NUM_FREQ] = np.pi / 2

    # Layer-1 weight padded to K=32 (rows 26..31 are zero).
    w1p = jnp.zeros((ENC_PACK, HIDDEN), jnp.float32).at[:ENC_DIM].set(params["w1"])

    # Packed per-feature vectors: rows = b1, ln1g, ln1b, b2, ln2g, ln2b.
    vecs = jnp.zeros((8, HIDDEN), jnp.float32)
    for i, k in enumerate(("b1", "ln1g", "ln1b", "b2", "ln2g", "ln2b")):
        vecs = vecs.at[i].set(params[k][0])

    # Merged layer-3: [g head | f head]  (g chunks stay at lane offsets k*dim_z).
    w3, b3 = params["w3"], params["b3"]
    w3m = jnp.concatenate([w3[:, HEAD_F1:], w3[:, :HEAD_F1]], axis=1)
    b3m = jnp.concatenate([b3[:, HEAD_F1:], b3[:, :HEAD_F1]], axis=1)

    # 0/1 chunk-sum indicator and its transpose (per-chunk softmax denominator).
    csum = np.zeros((g_width, HEAD_F1), np.float32)
    for c in range(HEAD_F1):
        csum[c * dim_z:(c + 1) * dim_z, c] = 1.0
    cbrd = csum.T.copy()

    return dict(
        sel=jnp.asarray(sel), off=jnp.asarray(off),
        w1p=w1p.astype(matmul_dtype),
        vecs=vecs,
        w2=params["w2"].astype(matmul_dtype),
        w3m=w3m.astype(matmul_dtype), b3m=b3m,
        csum=jnp.asarray(csum), cbrd=jnp.asarray(cbrd),
    )


def cgn_forward(x, params, dim_z, tile_rows=None, matmul_dtype=jnp.bfloat16):
    Nt, L, _ = x.shape
    B = Nt * L
    dim_u1 = L * HEAD_F1
    g_width = HEAD_F1 * dim_z
    w3_width = g_width + HEAD_F1

    # Big tiles (amortize per-step overhead), but aim for >=2 grid steps so the
    # "parallel" axis can shard across both TensorCores on v7x.
    if tile_rows is None:
        tile_rows = min(1024, max(128, _round_up(_cdiv(B, 2), 128)))
    else:
        tile_rows = max(8, _round_up(tile_rows, 8))
    B_pad = _round_up(B, tile_rows)
    grid = (B_pad // tile_rows,)

    x2d = x.reshape(B, IN_DIM).astype(jnp.float32)
    if B_pad != B:
        x2d = jnp.pad(x2d, ((0, B_pad - B), (0, 0)))

    kp = pack_cgn_params(params, dim_z, matmul_dtype)

    def full_spec(shape):
        return pl.BlockSpec(shape, lambda i: (0, 0))

    f1_out, g1_out = pl.pallas_call(
        make_cgn_kernel(dim_z, matmul_dtype),
        out_shape=(jax.ShapeDtypeStruct((B_pad, HEAD_F1), jnp.float32),
                   jax.ShapeDtypeStruct((B_pad, g_width), jnp.float32)),
        grid=grid,
        in_specs=[
            pl.BlockSpec((tile_rows, IN_DIM), lambda i: (i, 0)),   # x rows
            full_spec((IN_DIM, ENC_PACK)),                         # sel
            full_spec((1, ENC_PACK)),                              # off
            full_spec((ENC_PACK, HIDDEN)),                         # w1 packed
            full_spec((8, HIDDEN)),                                # biases / LN
            full_spec((HIDDEN, HIDDEN)),                           # w2
            full_spec((HIDDEN, w3_width)),                         # merged w3
            full_spec((1, w3_width)),                              # merged b3
            full_spec((g_width, HEAD_F1)),                         # chunk-sum ind.
            full_spec((HEAD_F1, g_width)),                         # its transpose
        ],
        out_specs=(pl.BlockSpec((tile_rows, HEAD_F1), lambda i: (i, 0)),
                   pl.BlockSpec((tile_rows, g_width), lambda i: (i, 0))),
        compiler_params=pltpu.CompilerParams(dimension_semantics=("parallel",)),
    )(x2d, kp["sel"], kp["off"], kp["w1p"], kp["vecs"], kp["w2"],
      kp["w3m"], kp["b3m"], kp["csum"], kp["cbrd"])

    f1 = f1_out[:B].reshape(Nt, dim_u1, 1)
    g1 = g1_out[:B].reshape(Nt, dim_u1, dim_z)
    f2 = jnp.broadcast_to(params["f2"], (Nt, dim_z, 1))
    g2 = jnp.broadcast_to(params["g2"], (Nt, dim_z, dim_z))
    return [f1, g1, f2, g2]


def cgn_forward_ref(x, params, dim_z):
    """Pure-JAX reference mirroring the PyTorch forward."""
    Nt, L, _ = x.shape
    B = Nt * L
    dim_u1 = L * HEAD_F1
    x2d = x.reshape(B, IN_DIM).astype(jnp.float32)
    freqs = jnp.asarray((2.0 ** np.arange(NUM_FREQ)) * np.pi, jnp.float32)
    x0f = x2d[:, 0:1] * freqs
    x1f = x2d[:, 1:2] * freqs
    enc = jnp.concatenate(
        [x2d, jnp.sin(x0f), jnp.cos(x0f), jnp.sin(x1f), jnp.cos(x1f)], axis=1)

    def ln(h, g, b):
        mu = jnp.mean(h, axis=-1, keepdims=True)
        var = jnp.mean((h - mu) ** 2, axis=-1, keepdims=True)
        return (h - mu) * jax.lax.rsqrt(var + LN_EPS) * g + b

    h = enc @ params["w1"] + params["b1"]
    h = _silu(ln(h, params["ln1g"], params["ln1b"]))
    h = h @ params["w2"] + params["b2"]
    h = _silu(ln(h, params["ln2g"], params["ln2b"]))
    out = h @ params["w3"] + params["b3"]
    f1 = out[:, :HEAD_F1].reshape(Nt, dim_u1, 1)
    g1 = out[:, HEAD_F1:].reshape(Nt, dim_u1, dim_z)
    g1 = jax.nn.softmax(g1, axis=-1)
    f2 = jnp.broadcast_to(params["f2"], (Nt, dim_z, 1))
    g2 = jnp.broadcast_to(params["g2"], (Nt, dim_z, dim_z))
    return [f1, g1, f2, g2]


if __name__ == "__main__":
    # Small forward-consistent shapes: Nt=2 time steps, L=8 query points
    # (=> dim_u1 = L*4 = 32), z_h=z_w=4 => dim_z = 32 (g head is 128 lanes).
    Nt, L = 2, 8
    z_h, z_w = 4, 4
    dim_z = z_h * z_w * 2

    key = jax.random.PRNGKey(0)
    k_param, k_x = jax.random.split(key)
    params = init_cgn_params(k_param, dim_z)
    x = jax.random.normal(k_x, (Nt, L, IN_DIM), dtype=jnp.float32)

    refs = jax.block_until_ready(cgn_forward_ref(x, params, dim_z))

    # 1) Strict check: f32 matmul path, tiny tiles (2-step grid exercises the
    #    pipelined / multi-step code path).
    outs32 = jax.block_until_ready(
        cgn_forward(x, params, dim_z, tile_rows=8, matmul_dtype=jnp.float32))
    tols32 = [(1e-4, 1e-4), (1e-4, 1e-5), (1e-6, 1e-6), (1e-6, 1e-6)]
    for o, r, (rt, at) in zip(outs32, refs, tols32):
        np.testing.assert_allclose(np.asarray(o), np.asarray(r), rtol=rt, atol=at)

    # 2) Default fast path: bf16 matmul operands (f32 accumulation; LayerNorm,
    #    phase and softmax stay f32), auto tile size.  Looser tolerance is
    #    expected from the bf16 operand rounding.
    outs = jax.block_until_ready(cgn_forward(x, params, dim_z))
    tols = [(5e-2, 5e-2), (5e-2, 5e-2), (1e-6, 1e-6), (1e-6, 1e-6)]
    for o, r, (rt, at) in zip(outs, refs, tols):
        np.testing.assert_allclose(np.asarray(o), np.asarray(r), rtol=rt, atol=at)

    print("KERNEL_OK")
</pallas_src>

<mosaic_0001>
module attributes {stable_mosaic.version = 11 : i64} {
  func.func @cgn_kernel(%arg0: i32, %arg1: memref<8x2xf32, #tpu.memory_space<vmem>>, %arg2: memref<2x32xf32, #tpu.memory_space<vmem>>, %arg3: memref<1x32xf32, #tpu.memory_space<vmem>>, %arg4: memref<32x64xf32, #tpu.memory_space<vmem>>, %arg5: memref<8x64xf32, #tpu.memory_space<vmem>>, %arg6: memref<64x64xf32, #tpu.memory_space<vmem>>, %arg7: memref<64x132xf32, #tpu.memory_space<vmem>>, %arg8: memref<1x132xf32, #tpu.memory_space<vmem>>, %arg9: memref<128x4xf32, #tpu.memory_space<vmem>>, %arg10: memref<4x128xf32, #tpu.memory_space<vmem>>, %arg11: memref<8x4xf32, #tpu.memory_space<vmem>>, %arg12: memref<8x128xf32, #tpu.memory_space<vmem>>) attributes {dimension_semantics = [#tpu.dimension_semantics<parallel>], iteration_bounds = array<i64: 2>, scalar_prefetch = 0 : i64, scratch_operands = 0 : i64, tpu.core_type = #tpu.core_type<tc>, window_params = [{transform_indices = @transform_0, window_bounds = array<i64: 8, 2>}, {pipeline_mode = #tpu.pipeline_mode<synchronous>, transform_indices = @transform_1, window_bounds = array<i64: 2, 32>}, {pipeline_mode = #tpu.pipeline_mode<synchronous>, transform_indices = @transform_2, window_bounds = array<i64: 1, 32>}, {pipeline_mode = #tpu.pipeline_mode<synchronous>, transform_indices = @transform_3, window_bounds = array<i64: 32, 64>}, {pipeline_mode = #tpu.pipeline_mode<synchronous>, transform_indices = @transform_4, window_bounds = array<i64: 8, 64>}, {pipeline_mode = #tpu.pipeline_mode<synchronous>, transform_indices = @transform_5, window_bounds = array<i64: 64, 64>}, {pipeline_mode = #tpu.pipeline_mode<synchronous>, transform_indices = @transform_6, window_bounds = array<i64: 64, 132>}, {pipeline_mode = #tpu.pipeline_mode<synchronous>, transform_indices = @transform_7, window_bounds = array<i64: 1, 132>}, {pipeline_mode = #tpu.pipeline_mode<synchronous>, transform_indices = @transform_8, window_bounds = array<i64: 128, 4>}, {pipeline_mode = #tpu.pipeline_mode<synchronous>, transform_indices = @transform_9, window_bounds = array<i64: 4, 128>}, {transform_indices = @transform_10, window_bounds = array<i64: 8, 4>}, {transform_indices = @transform_11, window_bounds = array<i64: 8, 128>}]} {
    %c0 = arith.constant 0 : index
    %c0_0 = arith.constant 0 : index
    %0 = vector.load %arg1[%c0, %c0_0] : memref<8x2xf32, #tpu.memory_space<vmem>>, vector<8x2xf32>
    %c0_1 = arith.constant 0 : index
    %c0_2 = arith.constant 0 : index
    %1 = vector.load %arg2[%c0_1, %c0_2] : memref<2x32xf32, #tpu.memory_space<vmem>>, vector<2x32xf32>
    %cst = arith.constant dense<0.000000e+00> : vector<8x32xf32>
    %2 = tpu.matmul %0, %1, %cst {dimension_numbers = #tpu.dot_dimension_numbers<[1], [0], [0], [1], [0, 0, 1, 1], [], []>} : vector<8x2xf32>, vector<2x32xf32>, vector<8x32xf32> -> vector<8x32xf32>
    %c0_3 = arith.constant 0 : index
    %c0_4 = arith.constant 0 : index
    %3 = vector.load %arg3[%c0_3, %c0_4] : memref<1x32xf32, #tpu.memory_space<vmem>>, vector<1x32xf32>
    %4 = vector.broadcast %3 : vector<1x32xf32> to vector<8x32xf32>
    %5 = arith.addf %2, %4 : vector<8x32xf32>
    %6 = tpu.iota {dimensions = array<i32: 1>} : vector<8x32xi32>
    %c2_i32 = arith.constant 2 : i32
    %7 = vector.broadcast %c2_i32 : i32 to vector<8x32xi32>
    %8 = arith.cmpi slt, %6, %7 : vector<8x32xi32>
    %9 = math.sin %5 : vector<8x32xf32>
    %10 = arith.select %8, %5, %9 : vector<8x32xi1>, vector<8x32xf32>
    %c0_5 = arith.constant 0 : index
    %c0_6 = arith.constant 0 : index
    %11 = vector.load %arg5[%c0_5, %c0_6] : memref<8x64xf32, #tpu.memory_space<vmem>>, vector<8x64xf32>
    %12 = vector.extract_strided_slice %11 {offsets = [0, 0], sizes = [1, 64], strides = [1, 1]} : vector<8x64xf32> to vector<1x64xf32>
    %13 = vector.extract_strided_slice %11 {offsets = [1, 0], sizes = [1, 64], strides = [1, 1]} : vector<8x64xf32> to vector<1x64xf32>
    %14 = vector.extract_strided_slice %11 {offsets = [2, 0], sizes = [1, 64], strides = [1, 1]} : vector<8x64xf32> to vector<1x64xf32>
    %15 = vector.extract_strided_slice %11 {offsets = [3, 0], sizes = [1, 64], strides = [1, 1]} : vector<8x64xf32> to vector<1x64xf32>
    %16 = vector.extract_strided_slice %11 {offsets = [4, 0], sizes = [1, 64], strides = [1, 1]} : vector<8x64xf32> to vector<1x64xf32>
    %17 = vector.extract_strided_slice %11 {offsets = [5, 0], sizes = [1, 64], strides = [1, 1]} : vector<8x64xf32> to vector<1x64xf32>
    %c0_7 = arith.constant 0 : index
    %c0_8 = arith.constant 0 : index
    %18 = vector.load %arg4[%c0_7, %c0_8] : memref<32x64xf32, #tpu.memory_space<vmem>>, vector<32x64xf32>
    %cst_9 = arith.constant dense<0.000000e+00> : vector<8x64xf32>
    %19 = tpu.matmul %10, %18, %cst_9 {dimension_numbers = #tpu.dot_dimension_numbers<[1], [0], [0], [1], [0, 0, 1, 1], [], []>} : vector<8x32xf32>, vector<32x64xf32>, vector<8x64xf32> -> vector<8x64xf32>
    %20 = vector.broadcast %12 : vector<1x64xf32> to vector<8x64xf32>
    %21 = arith.addf %19, %20 : vector<8x64xf32>
    %cst_10 = arith.constant dense<0.000000e+00> : vector<8xf32>
    %22 = vector.multi_reduction <add>, %21, %cst_10 [1] : vector<8x64xf32> to vector<8xf32>
    %23 = vector.shape_cast %22 : vector<8xf32> to vector<8x1xf32>
    %cst_11 = arith.constant 6.400000e+01 : f32
    %24 = vector.broadcast %cst_11 : f32 to vector<8x1xf32>
    %25 = arith.divf %23, %24 : vector<8x1xf32>
    %26 = arith.mulf %21, %21 : vector<8x64xf32>
    %cst_12 = arith.constant dense<0.000000e+00> : vector<8xf32>
    %27 = vector.multi_reduction <add>, %26, %cst_12 [1] : vector<8x64xf32> to vector<8xf32>
    %28 = vector.shape_cast %27 : vector<8xf32> to vector<8x1xf32>
    %cst_13 = arith.constant 6.400000e+01 : f32
    %29 = vector.broadcast %cst_13 : f32 to vector<8x1xf32>
    %30 = arith.divf %28, %29 : vector<8x1xf32>
    %31 = arith.mulf %25, %25 : vector<8x1xf32>
    %32 = arith.subf %30, %31 : vector<8x1xf32>
    %cst_14 = arith.constant 0.000000e+00 : f32
    %33 = vector.broadcast %cst_14 : f32 to vector<8x1xf32>
    %34 = arith.maximumf %32, %33 : vector<8x1xf32>
    %35 = vector.broadcast %25 : vector<8x1xf32> to vector<8x64xf32>
    %36 = arith.subf %21, %35 : vector<8x64xf32>
    %cst_15 = arith.constant 9.99999974E-6 : f32
    %37 = vector.broadcast %cst_15 : f32 to vector<8x1xf32>
    %38 = arith.addf %34, %37 : vector<8x1xf32>
    %39 = math.rsqrt %38 : vector<8x1xf32>
    %40 = vector.broadcast %39 : vector<8x1xf32> to vector<8x64xf32>
    %41 = arith.mulf %36, %40 : vector<8x64xf32>
    %42 = vector.broadcast %13 : vector<1x64xf32> to vector<8x64xf32>
    %43 = arith.mulf %41, %42 : vector<8x64xf32>
    %44 = vector.broadcast %14 : vector<1x64xf32> to vector<8x64xf32>
    %45 = arith.addf %43, %44 : vector<8x64xf32>
    %46 = arith.negf %45 : vector<8x64xf32>
    %47 = math.exp %46 : vector<8x64xf32>
    %cst_16 = arith.constant 1.000000e+00 : f32
    %48 = vector.broadcast %cst_16 : f32 to vector<8x64xf32>
    %49 = arith.addf %48, %47 : vector<8x64xf32>
    %50 = arith.divf %48, %49 : vector<8x64xf32>
    %51 = arith.mulf %45, %50 : vector<8x64xf32>
    %c0_17 = arith.constant 0 : index
    %c0_18 = arith.constant 0 : index
    %52 = vector.load %arg6[%c0_17, %c0_18] : memref<64x64xf32, #tpu.memory_space<vmem>>, vector<64x64xf32>
    %cst_19 = arith.constant dense<0.000000e+00> : vector<8x64xf32>
    %53 = tpu.matmul %51, %52, %cst_19 {dimension_numbers = #tpu.dot_dimension_numbers<[1], [0], [0], [1], [0, 0, 1, 1], [], []>} : vector<8x64xf32>, vector<64x64xf32>, vector<8x64xf32> -> vector<8x64xf32>
    %54 = vector.broadcast %15 : vector<1x64xf32> to vector<8x64xf32>
    %55 = arith.addf %53, %54 : vector<8x64xf32>
    %cst_20 = arith.constant dense<0.000000e+00> : vector<8xf32>
    %56 = vector.multi_reduction <add>, %55, %cst_20 [1] : vector<8x64xf32> to vector<8xf32>
    %57 = vector.shape_cast %56 : vector<8xf32> to vector<8x1xf32>
    %cst_21 = arith.constant 6.400000e+01 : f32
    %58 = vector.broadcast %cst_21 : f32 to vector<8x1xf32>
    %59 = arith.divf %57, %58 : vector<8x1xf32>
    %60 = arith.mulf %55, %55 : vector<8x64xf32>
    %cst_22 = arith.constant dense<0.000000e+00> : vector<8xf32>
    %61 = vector.multi_reduction <add>, %60, %cst_22 [1] : vector<8x64xf32> to vector<8xf32>
    %62 = vector.shape_cast %61 : vector<8xf32> to vector<8x1xf32>
    %cst_23 = arith.constant 6.400000e+01 : f32
    %63 = vector.broadcast %cst_23 : f32 to vector<8x1xf32>
    %64 = arith.divf %62, %63 : vector<8x1xf32>
    %65 = arith.mulf %59, %59 : vector<8x1xf32>
    %66 = arith.subf %64, %65 : vector<8x1xf32>
    %cst_24 = arith.constant 0.000000e+00 : f32
    %67 = vector.broadcast %cst_24 : f32 to vector<8x1xf32>
    %68 = arith.maximumf %66, %67 : vector<8x1xf32>
    %69 = vector.broadcast %59 : vector<8x1xf32> to vector<8x64xf32>
    %70 = arith.subf %55, %69 : vector<8x64xf32>
    %cst_25 = arith.constant 9.99999974E-6 : f32
    %71 = vector.broadcast %cst_25 : f32 to vector<8x1xf32>
    %72 = arith.addf %68, %71 : vector<8x1xf32>
    %73 = math.rsqrt %72 : vector<8x1xf32>
    %74 = vector.broadcast %73 : vector<8x1xf32> to vector<8x64xf32>
    %75 = arith.mulf %70, %74 : vector<8x64xf32>
    %76 = vector.broadcast %16 : vector<1x64xf32> to vector<8x64xf32>
    %77 = arith.mulf %75, %76 : vector<8x64xf32>
    %78 = vector.broadcast %17 : vector<1x64xf32> to vector<8x64xf32>
    %79 = arith.addf %77, %78 : vector<8x64xf32>
    %80 = arith.negf %79 : vector<8x64xf32>
    %81 = math.exp %80 : vector<8x64xf32>
    %cst_26 = arith.constant 1.000000e+00 : f32
    %82 = vector.broadcast %cst_26 : f32 to vector<8x64xf32>
    %83 = arith.addf %82, %81 : vector<8x64xf32>
    %84 = arith.divf %82, %83 : vector<8x64xf32>
    %85 = arith.mulf %79, %84 : vector<8x64xf32>
    %c0_27 = arith.constant 0 : index
    %c0_28 = arith.constant 0 : index
    %86 = vector.load %arg7[%c0_27, %c0_28] : memref<64x132xf32, #tpu.memory_space<vmem>>, vector<64x132xf32>
    %cst_29 = arith.constant dense<0.000000e+00> : vector<8x132xf32>
    %87 = tpu.matmul %85, %86, %cst_29 {dimension_numbers = #tpu.dot_dimension_numbers<[1], [0], [0], [1], [0, 0, 1, 1], [], []>} : vector<8x64xf32>, vector<64x132xf32>, vector<8x132xf32> -> vector<8x132xf32>
    %c0_30 = arith.constant 0 : index
    %c0_31 = arith.constant 0 : index
    %88 = vector.load %arg8[%c0_30, %c0_31] : memref<1x132xf32, #tpu.memory_space<vmem>>, vector<1x132xf32>
    %89 = vector.broadcast %88 : vector<1x132xf32> to vector<8x132xf32>
    %90 = arith.addf %87, %89 : vector<8x132xf32>
    %91 = vector.extract_strided_slice %90 {offsets = [0, 0], sizes = [8, 128], strides = [1, 1]} : vector<8x132xf32> to vector<8x128xf32>
    %92 = vector.extract_strided_slice %90 {offsets = [0, 128], sizes = [8, 4], strides = [1, 1]} : vector<8x132xf32> to vector<8x4xf32>
    %c0_32 = arith.constant 0 : index
    %c0_33 = arith.constant 0 : index
    %93 = vector.load %arg11[%c0_32, %c0_33] : memref<8x4xf32, #tpu.memory_space<vmem>>, vector<8x4xf32>
    tpu.vector_store %arg11[%c0_32, %c0_33], %92 {strides = array<i32>} : memref<8x4xf32, #tpu.memory_space<vmem>>, vector<8x4xf32>,
    %cst_34 = arith.constant dense<0xFF800000> : vector<8xf32>
    %94 = vector.multi_reduction <maximumf>, %91, %cst_34 [1] : vector<8x128xf32> to vector<8xf32>
    %95 = vector.shape_cast %94 : vector<8xf32> to vector<8x1xf32>
    %96 = vector.broadcast %95 : vector<8x1xf32> to vector<8x128xf32>
    %97 = arith.subf %91, %96 : vector<8x128xf32>
    %98 = math.exp %97 : vector<8x128xf32>
    %c0_35 = arith.constant 0 : index
    %c0_36 = arith.constant 0 : index
    %99 = vector.load %arg9[%c0_35, %c0_36] : memref<128x4xf32, #tpu.memory_space<vmem>>, vector<128x4xf32>
    %cst_37 = arith.constant dense<0.000000e+00> : vector<8x4xf32>
    %100 = tpu.matmul %98, %99, %cst_37 {dimension_numbers = #tpu.dot_dimension_numbers<[1], [0], [0], [1], [0, 0, 1, 1], [], []>} : vector<8x128xf32>, vector<128x4xf32>, vector<8x4xf32> -> vector<8x4xf32>
    %cst_38 = arith.constant 1.000000e-30 : f32
    %101 = vector.broadcast %cst_38 : f32 to vector<8x4xf32>
    %102 = arith.maximumf %100, %101 : vector<8x4xf32>
    %103 = tpu.reciprocal %102 : vector<8x4xf32> -> vector<8x4xf32>
    %c0_39 = arith.constant 0 : index
    %c0_40 = arith.constant 0 : index
    %104 = vector.load %arg10[%c0_39, %c0_40] : memref<4x128xf32, #tpu.memory_space<vmem>>, vector<4x128xf32>
    %cst_41 = arith.constant dense<0.000000e+00> : vector<8x128xf32>
    %105 = tpu.matmul %103, %104, %cst_41 {dimension_numbers = #tpu.dot_dimension_numbers<[1], [0], [0], [1], [0, 0, 1, 1], [], []>} : vector<8x4xf32>, vector<4x128xf32>, vector<8x128xf32> -> vector<8x128xf32>
    %106 = arith.mulf %98, %105 : vector<8x128xf32>
    %c0_42 = arith.constant 0 : index
    %c0_43 = arith.constant 0 : index
    %107 = vector.load %arg12[%c0_42, %c0_43] : memref<8x128xf32, #tpu.memory_space<vmem>>, vector<8x128xf32>
    tpu.vector_store %arg12[%c0_42, %c0_43], %106 {strides = array<i32>} : memref<8x128xf32, #tpu.memory_space<vmem>>, vector<8x128xf32>,
    return
  }
  func.func @transform_0(%arg0: i32) -> (i32, i32) {
    %c0_i32 = arith.constant 0 : i32
    %c0_i32_0 = arith.constant 0 : i32
    return %arg0, %c0_i32 : i32, i32
  }
  func.func @transform_1(%arg0: i32) -> (i32, i32) {
    %c0_i32 = arith.constant 0 : i32
    %c0_i32_0 = arith.constant 0 : i32
    %c0_i32_1 = arith.constant 0 : i32
    return %c0_i32, %c0_i32_0 : i32, i32
  }
  func.func @transform_2(%arg0: i32) -> (i32, i32) {
    %c0_i32 = arith.constant 0 : i32
    %c0_i32_0 = arith.constant 0 : i32
    %c0_i32_1 = arith.constant 0 : i32
    return %c0_i32, %c0_i32_0 : i32, i32
  }
  func.func @transform_3(%arg0: i32) -> (i32, i32) {
    %c0_i32 = arith.constant 0 : i32
    %c0_i32_0 = arith.constant 0 : i32
    %c0_i32_1 = arith.constant 0 : i32
    return %c0_i32, %c0_i32_0 : i32, i32
  }
  func.func @transform_4(%arg0: i32) -> (i32, i32) {
    %c0_i32 = arith.constant 0 : i32
    %c0_i32_0 = arith.constant 0 : i32
    %c0_i32_1 = arith.constant 0 : i32
    return %c0_i32, %c0_i32_0 : i32, i32
  }
  func.func @transform_5(%arg0: i32) -> (i32, i32) {
    %c0_i32 = arith.constant 0 : i32
    %c0_i32_0 = arith.constant 0 : i32
    %c0_i32_1 = arith.constant 0 : i32
    return %c0_i32, %c0_i32_0 : i32, i32
  }
  func.func @transform_6(%arg0: i32) -> (i32, i32) {
    %c0_i32 = arith.constant 0 : i32
    %c0_i32_0 = arith.constant 0 : i32
    %c0_i32_1 = arith.constant 0 : i32
    return %c0_i32, %c0_i32_0 : i32, i32
  }
  func.func @transform_7(%arg0: i32) -> (i32, i32) {
    %c0_i32 = arith.constant 0 : i32
    %c0_i32_0 = arith.constant 0 : i32
    %c0_i32_1 = arith.constant 0 : i32
    return %c0_i32, %c0_i32_0 : i32, i32
  }
  func.func @transform_8(%arg0: i32) -> (i32, i32) {
    %c0_i32 = arith.constant 0 : i32
    %c0_i32_0 = arith.constant 0 : i32
    %c0_i32_1 = arith.constant 0 : i32
    return %c0_i32, %c0_i32_0 : i32, i32
  }
  func.func @transform_9(%arg0: i32) -> (i32, i32) {
    %c0_i32 = arith.constant 0 : i32
    %c0_i32_0 = arith.constant 0 : i32
    %c0_i32_1 = arith.constant 0 : i32
    return %c0_i32, %c0_i32_0 : i32, i32
  }
  func.func @transform_10(%arg0: i32) -> (i32, i32) {
    %c0_i32 = arith.constant 0 : i32
    %c0_i32_0 = arith.constant 0 : i32
    return %arg0, %c0_i32 : i32, i32
  }
  func.func @transform_11(%arg0: i32) -> (i32, i32) {
    %c0_i32 = arith.constant 0 : i32
    %c0_i32_0 = arith.constant 0 : i32
    return %arg0, %c0_i32 : i32, i32
  }
}

</mosaic_0001>

<llo_original>
// kernel: tpu_custom_call.1
$region0: #{tpu_custom_call.1}
  #allocation0 [shape = 'u32[]', space=smem, size = 0x4, offset = 0x4, fixed_abs, tag = 'smem constant byte address 0x4 - core index']
  #allocation1 [shape = 'u32[144,128]{1,0:T(1,128)}', space=vmem, size = 0x12000, scoped, tag = 'internal scratch']
  %s0 = inlined_call_operand.vmem [shape: f32[16,2], index: 0, kind: input, shape index: {}]
  %s1 = inlined_call_operand.hbm [shape: f32[2,32], index: 1, kind: input, shape index: {}]
  %s2 = inlined_call_operand.hbm [shape: f32[1,32], index: 2, kind: input, shape index: {}]
  %s3 = inlined_call_operand.vmem [shape: f32[32,64], index: 3, kind: input, shape index: {}]
  %s4 = inlined_call_operand.vmem [shape: f32[8,64], index: 4, kind: input, shape index: {}]
  %s5 = inlined_call_operand.hbm [shape: f32[64,64], index: 5, kind: input, shape index: {}]
  %s6 = inlined_call_operand.vmem [shape: f32[64,132], index: 6, kind: input, shape index: {}]
  %s7 = inlined_call_operand.hbm [shape: f32[1,132], index: 7, kind: input, shape index: {}]
  %s8 = inlined_call_operand.vmem [shape: f32[128,4], index: 8, kind: input, shape index: {}]
  %s9 = inlined_call_operand.vmem [shape: f32[4,128], index: 9, kind: input, shape index: {}]
  %s10 = inlined_call_operand.vmem [shape: f32[16,4], index: 10, kind: output, shape index: {0}]
  %s11 = inlined_call_operand.hbm [shape: f32[16,128], index: 11, kind: output, shape index: {1}]
  %12 = xla_tuple %s10, %s11
  %s13 = sld [smem:[#allocation0]]
  $region97: #{tpu_custom_call.1} parent=0
    _
  %s15 = ssub.s32 1, %s13
  %s16 = scalar_select 0, %s15, %s13
  $region1: #{tpu_custom_call.1} parent=0
    #allocation2 [shape = 'u8[1024]{0}', space=vmem, size = 0x400, scoped, tag = 'input window, operand 1, single buffered']
    #allocation3 [shape = 's32[2]{0}', space=sflag, size = 0x8, scoped, tag = 'scoped memory for tpu_custom_call.1']
    #allocation4 [shape = 's32[2]{0}', space=sflag, size = 0x8, scoped, tag = 'scoped memory for tpu_custom_call.1']
    #allocation5 [shape = 'u8[512]{0}', space=vmem, size = 0x400, scoped, tag = 'input window, operand 2, single buffered']
    #allocation6 [shape = 's32[1]{0}', space=sflag, size = 0x4, scoped, tag = 'scoped memory for tpu_custom_call.1']
    #allocation7 [shape = 'u8[32768]{0}', space=vmem, size = 0x8000, scoped, tag = 'input window, operand 5, single buffered']
    #allocation8 [shape = 'u8[1024]{0}', space=vmem, size = 0x400, scoped, tag = 'input window, operand 7, single buffered']
    #allocation9 [shape = 's32[1]{0}', space=sflag, size = 0x4, scoped, tag = 'scoped memory for tpu_custom_call.1']
    #allocation10 [shape = 'u8[8192]{0}', space=vmem, size = 0x2000, scoped, tag = 'output window, operand 1']
    %17 = vsyncpa [#allocation3], 0
    %18 = vsyncpa [#allocation6], 0
    %19 = vsyncpa [#allocation9], 0
    %20 = vsyncpa [#allocation4], 0
    %s21 = scalar_lea.sflag [#allocation4], 1
    %22 = vsyncpa %s21, 0
    loop: start=0, step=1, limit=4
    $region2: #{tpu_custom_call.1} parent=1 // loop_pre_header
      _
    $region3: #{tpu_custom_call.1} parent=1 // loop_header
      %s24 = sphi 0, %s28
      %p25 = scmp.ge.s32.totalorder %s24, 4
      %s34 = sphi 0, %s36
      %s37 = sphi 0, %s34
      %s38 = sphi 0, %s37
      %s54 = sphi 0, %s38
      %s58 = sphi 0, %s58
      %s60 = sphi 0, %s58
      %s61 = sphi 0, %s60
      %s75 = sphi 0, %s61
      %s79 = sphi 0, %s79
      %s81 = sphi 0, %s79
      %s82 = sphi 0, %s81
      %s96 = sphi 0, %s82
      %s100 = sphi 0, %s100
      %s102 = sphi 0, %s100
      %s103 = sphi 0, %s102
      %s117 = sphi 0, %s103
      %s121 = sphi 0, %s121
      %s123 = sphi 0, %s121
      %s124 = sphi 0, %s123
      %s138 = sphi 0, %s124
      %s142 = sphi 0, %s142
      %s144 = sphi 0, %s142
      %s145 = sphi 0, %s144
      %s159 = sphi 0, %s145
      %s163 = sphi 0, %s163
      %s165 = sphi 0, %s163
      %s166 = sphi 0, %s165
      %s180 = sphi 0, %s166
      %s184 = sphi 0, %s184
      %s186 = sphi 0, %s184
      %s187 = sphi 0, %s186
      %s201 = sphi 0, %s187
      %s205 = sphi 0, %s205
      %s207 = sphi 0, %s205
      %s208 = sphi 0, %s207
      %s222 = sphi 0, %s208
      %s226 = sphi 0, %s226
      %s228 = sphi 0, %s226
      %s229 = sphi 0, %s228
      %s243 = sphi 0, %s229
      %s249 = sphi 0, %s251
      %s252 = sphi 0, %s249
      %s253 = sphi 0, %s252
      %s269 = sphi 0, %s253
      %s275 = sphi 0, %s277
      %s278 = sphi 0, %s275
      %s279 = sphi 0, %s278
      %s295 = sphi 0, %s279
    $region4: #{tpu_custom_call.1} parent=1 // loop_header_branch
      %27 = sbr.rel (%p25) target = $region8
    $region5: #{tpu_custom_call.1} parent=1 // loop_body
      %s29 = ssub.s32 %s24, 1
      %s30 = ssub.s32 %s24, 2
      %s31 = sadd.s32 %s24, 1
      %s32 = ssub.s32 %s24, %s31
      %p33 = scmp.eq.s32.totalorder %s32, 0
      %s35 = sadd.s32 %s34, 1
      %s36 = scalar_select %p33, %s34, %s35
      %p39 = pneg %p33
      %p40 = scmp.eq.s32.totalorder %s24, 1
      %p41 = por %p39, %p40
      %p42 = scmp.ne.s32.totalorder %s34, %s37
      %p43 = scmp.eq.s32.totalorder %s24, 0
      %p44 = por %p42, %p43
      %p45 = scmp.ne.s32.totalorder %s34, %s37
      %p46 = scmp.eq.s32.totalorder %s29, 1
      %p47 = por %p45, %p46
      %p48 = scmp.ne.s32.totalorder %s37, %s38
      %p49 = scmp.eq.s32.totalorder %s29, 0
      %p50 = por %p48, %p49
      %p51 = scmp.ne.s32.totalorder %s37, %s38
      %p52 = scmp.eq.s32.totalorder %s30, 1
      %p53 = por %p51, %p52
      %p55 = scmp.ne.s32.totalorder %s38, %s54
      %p56 = scmp.eq.s32.totalorder %s30, 0
      %p57 = por %p55, %p56
      %s59 = sadd.s32 %s58, 1
      %p62 = scmp.eq.s32.totalorder %s24, 1
      %p63 = scmp.ne.s32.totalorder %s58, %s60
      %p64 = scmp.eq.s32.totalorder %s24, 0
      %p65 = por %p63, %p64
      %p66 = scmp.ne.s32.totalorder %s58, %s60
      %p67 = scmp.eq.s32.totalorder %s29, 1
      %p68 = por %p66, %p67
      %p69 = scmp.ne.s32.totalorder %s60, %s61
      %p70 = scmp.eq.s32.totalorder %s29, 0
      %p71 = por %p69, %p70
      %p72 = scmp.ne.s32.totalorder %s60, %s61
      %p73 = scmp.eq.s32.totalorder %s30, 1
      %p74 = por %p72, %p73
      %p76 = scmp.ne.s32.totalorder %s61, %s75
      %p77 = scmp.eq.s32.totalorder %s30, 0
      %p78 = por %p76, %p77
      %s80 = sadd.s32 %s79, 1
      %p83 = scmp.eq.s32.totalorder %s24, 1
      %p84 = scmp.ne.s32.totalorder %s79, %s81
      %p85 = scmp.eq.s32.totalorder %s24, 0
      %p86 = por %p84, %p85
      %p87 = scmp.ne.s32.totalorder %s79, %s81
      %p88 = scmp.eq.s32.totalorder %s29, 1
      %p89 = por %p87, %p88
      %p90 = scmp.ne.s32.totalorder %s81, %s82
      %p91 = scmp.eq.s32.totalorder %s29, 0
      %p92 = por %p90, %p91
      %p93 = scmp.ne.s32.totalorder %s81, %s82
      %p94 = scmp.eq.s32.totalorder %s30, 1
      %p95 = por %p93, %p94
      %p97 = scmp.ne.s32.totalorder %s82, %s96
      %p98 = scmp.eq.s32.totalorder %s30, 0
      %p99 = por %p97, %p98
      %s101 = sadd.s32 %s100, 1
      %p104 = scmp.eq.s32.totalorder %s24, 1
      %p105 = scmp.ne.s32.totalorder %s100, %s102
      %p106 = scmp.eq.s32.totalorder %s24, 0
      %p107 = por %p105, %p106
      %p108 = scmp.ne.s32.totalorder %s100, %s102
      %p109 = scmp.eq.s32.totalorder %s29, 1
      %p110 = por %p108, %p109
      %p111 = scmp.ne.s32.totalorder %s102, %s103
      %p112 = scmp.eq.s32.totalorder %s29, 0
      %p113 = por %p111, %p112
      %p114 = scmp.ne.s32.totalorder %s102, %s103
      %p115 = scmp.eq.s32.totalorder %s30, 1
      %p116 = por %p114, %p115
      %p118 = scmp.ne.s32.totalorder %s103, %s117
      %p119 = scmp.eq.s32.totalorder %s30, 0
      %p120 = por %p118, %p119
      %s122 = sadd.s32 %s121, 1
      %p125 = scmp.eq.s32.totalorder %s24, 1
      %p126 = scmp.ne.s32.totalorder %s121, %s123
      %p127 = scmp.eq.s32.totalorder %s24, 0
      %p128 = por %p126, %p127
      %p129 = scmp.ne.s32.totalorder %s121, %s123
      %p130 = scmp.eq.s32.totalorder %s29, 1
      %p131 = por %p129, %p130
      %p132 = scmp.ne.s32.totalorder %s123, %s124
      %p133 = scmp.eq.s32.totalorder %s29, 0
      %p134 = por %p132, %p133
      %p135 = scmp.ne.s32.totalorder %s123, %s124
      %p136 = scmp.eq.s32.totalorder %s30, 1
      %p137 = por %p135, %p136
      %p139 = scmp.ne.s32.totalorder %s124, %s138
      %p140 = scmp.eq.s32.totalorder %s30, 0
      %p141 = por %p139, %p140
      %s143 = sadd.s32 %s142, 1
      %p146 = scmp.eq.s32.totalorder %s24, 1
      %p147 = scmp.ne.s32.totalorder %s142, %s144
      %p148 = scmp.eq.s32.totalorder %s24, 0
      %p149 = por %p147, %p148
      %p150 = scmp.ne.s32.totalorder %s142, %s144
      %p151 = scmp.eq.s32.totalorder %s29, 1
      %p152 = por %p150, %p151
      %p153 = scmp.ne.s32.totalorder %s144, %s145
      %p154 = scmp.eq.s32.totalorder %s29, 0
      %p155 = por %p153, %p154
      %p156 = scmp.ne.s32.totalorder %s144, %s145
      %p157 = scmp.eq.s32.totalorder %s30, 1
      %p158 = por %p156, %p157
      %p160 = scmp.ne.s32.totalorder %s145, %s159
      %p161 = scmp.eq.s32.totalorder %s30, 0
      %p162 = por %p160, %p161
      %s164 = sadd.s32 %s163, 1
      %p167 = scmp.eq.s32.totalorder %s24, 1
      %p168 = scmp.ne.s32.totalorder %s163, %s165
      %p169 = scmp.eq.s32.totalorder %s24, 0
      %p170 = por %p168, %p169
      %p171 = scmp.ne.s32.totalorder %s163, %s165
      %p172 = scmp.eq.s32.totalorder %s29, 1
      %p173 = por %p171, %p172
      %p174 = scmp.ne.s32.totalorder %s165, %s166
      %p175 = scmp.eq.s32.totalorder %s29, 0
      %p176 = por %p174, %p175
      %p177 = scmp.ne.s32.totalorder %s165, %s166
      %p178 = scmp.eq.s32.totalorder %s30, 1
      %p179 = por %p177, %p178
      %p181 = scmp.ne.s32.totalorder %s166, %s180
      %p182 = scmp.eq.s32.totalorder %s30, 0
      %p183 = por %p181, %p182
      %s185 = sadd.s32 %s184, 1
      %p188 = scmp.eq.s32.totalorder %s24, 1
      %p189 = scmp.ne.s32.totalorder %s184, %s186
      %p190 = scmp.eq.s32.totalorder %s24, 0
      %p191 = por %p189, %p190
      %p192 = scmp.ne.s32.totalorder %s184, %s186
      %p193 = scmp.eq.s32.totalorder %s29, 1
      %p194 = por %p192, %p193
      %p195 = scmp.ne.s32.totalorder %s186, %s187
      %p196 = scmp.eq.s32.totalorder %s29, 0
      %p197 = por %p195, %p196
      %p198 = scmp.ne.s32.totalorder %s186, %s187
      %p199 = scmp.eq.s32.totalorder %s30, 1
      %p200 = por %p198, %p199
      %p202 = scmp.ne.s32.totalorder %s187, %s201
      %p203 = scmp.eq.s32.totalorder %s30, 0
      %p204 = por %p202, %p203
      %s206 = sadd.s32 %s205, 1
      %p209 = scmp.eq.s32.totalorder %s24, 1
      %p210 = scmp.ne.s32.totalorder %s205, %s207
      %p211 = scmp.eq.s32.totalorder %s24, 0
      %p212 = por %p210, %p211
      %p213 = scmp.ne.s32.totalorder %s205, %s207
      %p214 = scmp.eq.s32.totalorder %s29, 1
      %p215 = por %p213, %p214
      %p216 = scmp.ne.s32.totalorder %s207, %s208
      %p217 = scmp.eq.s32.totalorder %s29, 0
      %p218 = por %p216, %p217
      %p219 = scmp.ne.s32.totalorder %s207, %s208
      %p220 = scmp.eq.s32.totalorder %s30, 1
      %p221 = por %p219, %p220
      %p223 = scmp.ne.s32.totalorder %s208, %s222
      %p224 = scmp.eq.s32.totalorder %s30, 0
      %p225 = por %p223, %p224
      %s227 = sadd.s32 %s226, 1
      %p230 = scmp.eq.s32.totalorder %s24, 1
      %p231 = scmp.ne.s32.totalorder %s226, %s228
      %p232 = scmp.eq.s32.totalorder %s24, 0
      %p233 = por %p231, %p232
      %p234 = scmp.ne.s32.totalorder %s226, %s228
      %p235 = scmp.eq.s32.totalorder %s29, 1
      %p236 = por %p234, %p235
      %p237 = scmp.ne.s32.totalorder %s228, %s229
      %p238 = scmp.eq.s32.totalorder %s29, 0
      %p239 = por %p237, %p238
      %p240 = scmp.ne.s32.totalorder %s228, %s229
      %p241 = scmp.eq.s32.totalorder %s30, 1
      %p242 = por %p240, %p241
      %p244 = scmp.ne.s32.totalorder %s229, %s243
      %p245 = scmp.eq.s32.totalorder %s30, 0
      %p246 = por %p244, %p245
      %s247 = ssub.s32 %s24, %s31
      %p248 = scmp.eq.s32.totalorder %s247, 0
      %s250 = sadd.s32 %s249, 1
      %s251 = scalar_select %p248, %s249, %s250
      %p254 = pneg %p248
      %p255 = scmp.eq.s32.totalorder %s24, 1
      %p256 = por %p254, %p255
      %p257 = scmp.ne.s32.totalorder %s249, %s252
      %p258 = scmp.eq.s32.totalorder %s24, 0
      %p259 = por %p257, %p258
      %p260 = scmp.ne.s32.totalorder %s249, %s252
      %p261 = scmp.eq.s32.totalorder %s29, 1
      %p262 = por %p260, %p261
      %p263 = scmp.ne.s32.totalorder %s252, %s253
      %p264 = scmp.eq.s32.totalorder %s29, 0
      %p265 = por %p263, %p264
      %p266 = scmp.ne.s32.totalorder %s252, %s253
      %p267 = scmp.eq.s32.totalorder %s30, 1
      %p268 = por %p266, %p267
      %p270 = scmp.ne.s32.totalorder %s253, %s269
      %p271 = scmp.eq.s32.totalorder %s30, 0
      %p272 = por %p270, %p271
      %s273 = ssub.s32 %s24, %s31
      %p274 = scmp.eq.s32.totalorder %s273, 0
      %s276 = sadd.s32 %s275, 1
      %s277 = scalar_select %p274, %s275, %s276
      %p280 = pneg %p274
      %p281 = scmp.eq.s32.totalorder %s24, 1
      %p282 = por %p280, %p281
      %p283 = scmp.ne.s32.totalorder %s275, %s278
      %p284 = scmp.eq.s32.totalorder %s24, 0
      %p285 = por %p283, %p284
      %p286 = scmp.ne.s32.totalorder %s275, %s278
      %p287 = scmp.eq.s32.totalorder %s29, 1
      %p288 = por %p286, %p287
      %p289 = scmp.ne.s32.totalorder %s278, %s279
      %p290 = scmp.eq.s32.totalorder %s29, 0
      %p291 = por %p289, %p290
      %p292 = scmp.ne.s32.totalorder %s278, %s279
      %p293 = scmp.eq.s32.totalorder %s30, 1
      %p294 = por %p292, %p293
      %p296 = scmp.ne.s32.totalorder %s279, %s295
      %p297 = scmp.eq.s32.totalorder %s30, 0
      %p298 = por %p296, %p297
      %p299 = scmp.le.s32.totalorder 1, %s24
      %p300 = scmp.lt.s32.totalorder %s24, 3
      %p301 = pnand %p299, %p300
      %p302 = pneg %p301
      // Predicated region
      $region9: #{tpu_custom_call.1} parent=5 // pred_check
        _
      $region10: #{tpu_custom_call.1} parent=5 // pred_check_branch
        %304 = sbr.rel (%p301) target = $region12
      $region11: #{tpu_custom_call.1} parent=5 // pred_region
        %s305 = ssub.s32 %s24, 1
        // Predicated region
        $region13: #{tpu_custom_call.1} parent=11 // pred_check
          %p306 = pneg %p71
        $region14: #{tpu_custom_call.1} parent=11 // pred_check_branch
          %308 = sbr.rel (%p306) target = $region16
        $region15: #{tpu_custom_call.1} parent=11 // pred_region
          %s310 = ssub.s32 32, 32
          %311 = vsyncadd [#allocation3], %s310
          %s313 = sshll.u32 [#allocation2], 4
          %s314 = int_to_ptr.vmem [resolvable:$true] %s313
          %316 = dma.hbm_to_vmem [thread:$0]  %s1, 32, %s314, [#allocation3]
        $region16: #{tpu_custom_call.1} parent=11 // pred_fallthru
          _
        // Predicated region
        $region17: #{tpu_custom_call.1} parent=11 // pred_check
          %p317 = pneg %p92
        $region18: #{tpu_custom_call.1} parent=11 // pred_check_branch
          %319 = sbr.rel (%p317) target = $region20
        $region19: #{tpu_custom_call.1} parent=11 // pred_region
          %s321 = ssub.s32 16, 16
          %322 = vsyncadd [#allocation6], %s321
          %s324 = sshll.u32 [#allocation5], 4
          %s325 = int_to_ptr.vmem [resolvable:$true] %s324
          %327 = dma.hbm_to_vmem [thread:$0]  %s2, 16, %s325, [#allocation6]
        $region20: #{tpu_custom_call.1} parent=11 // pred_fallthru
          _
        // Predicated region
        $region21: #{tpu_custom_call.1} parent=11 // pred_check
          %p328 = pneg %p113
        $region22: #{tpu_custom_call.1} parent=11 // pred_check_branch
          %330 = sbr.rel (%p328) target = $region24
        $region23: #{tpu_custom_call.1} parent=11 // pred_region
          _
        $region24: #{tpu_custom_call.1} parent=11 // pred_fallthru
          _
        // Predicated region
        $region25: #{tpu_custom_call.1} parent=11 // pred_check
          %p331 = pneg %p134
        $region26: #{tpu_custom_call.1} parent=11 // pred_check_branch
          %333 = sbr.rel (%p331) target = $region28
        $region27: #{tpu_custom_call.1} parent=11 // pred_region
          _
        $region28: #{tpu_custom_call.1} parent=11 // pred_fallthru
          _
        // Predicated region
        $region29: #{tpu_custom_call.1} parent=11 // pred_check
          %p334 = pneg %p155
        $region30: #{tpu_custom_call.1} parent=11 // pred_check_branch
          %336 = sbr.rel (%p334) target = $region32
        $region31: #{tpu_custom_call.1} parent=11 // pred_region
          %s338 = ssub.s32 1024, 1024
          %339 = vsyncadd [#allocation6], %s338
          %s340 = sshll.u32 [#allocation7], 4
          %s341 = int_to_ptr.vmem [resolvable:$true] %s340
          %346 = dma.hbm_to_vmem [thread:$0]  %s5, 1024, %s341, [#allocation6], 128, 128, 8
        $region32: #{tpu_custom_call.1} parent=11 // pred_fallthru
          _
        // Predicated region
        $region33: #{tpu_custom_call.1} parent=11 // pred_check
          %p347 = pneg %p176
        $region34: #{tpu_custom_call.1} parent=11 // pred_check_branch
          %349 = sbr.rel (%p347) target = $region36
        $region35: #{tpu_custom_call.1} parent=11 // pred_region
          _
        $region36: #{tpu_custom_call.1} parent=11 // pred_fallthru
          _
        // Predicated region
        $region37: #{tpu_custom_call.1} parent=11 // pred_check
          %p350 = pneg %p197
        $region38: #{tpu_custom_call.1} parent=11 // pred_check_branch
          %352 = sbr.rel (%p350) target = $region40
        $region39: #{tpu_custom_call.1} parent=11 // pred_region
          %s354 = ssub.s32 32, 32
          %355 = vsyncadd [#allocation9], %s354
          %s357 = sshll.u32 [#allocation8], 4
          %s358 = int_to_ptr.vmem [resolvable:$true] %s357
          %360 = dma.hbm_to_vmem [thread:$0]  %s7, 32, %s358, [#allocation9]
        $region40: #{tpu_custom_call.1} parent=11 // pred_fallthru
          _
        // Predicated region
        $region41: #{tpu_custom_call.1} parent=11 // pred_check
          %p361 = pneg %p218
        $region42: #{tpu_custom_call.1} parent=11 // pred_check_branch
          %363 = sbr.rel (%p361) target = $region44
        $region43: #{tpu_custom_call.1} parent=11 // pred_region
          _
        $region44: #{tpu_custom_call.1} parent=11 // pred_fallthru
          _
        // Predicated region
        $region45: #{tpu_custom_call.1} parent=11 // pred_check
          %p364 = pneg %p239
        $region46: #{tpu_custom_call.1} parent=11 // pred_check_branch
          %366 = sbr.rel (%p364) target = $region48
        $region47: #{tpu_custom_call.1} parent=11 // pred_region
          _
        $region48: #{tpu_custom_call.1} parent=11 // pred_fallthru
          _
      $region12: #{tpu_custom_call.1} parent=5 // pred_fallthru
        _
      %p367 = scmp.lt.s32.totalorder %s24, 2
      // Predicated region
      $region49: #{tpu_custom_call.1} parent=5 // pred_check
        %p368 = pneg %p367
      $region50: #{tpu_custom_call.1} parent=5 // pred_check_branch
        %370 = sbr.rel (%p368) target = $region52
      $region51: #{tpu_custom_call.1} parent=5 // pred_region
        // Predicated region
        $region53: #{tpu_custom_call.1} parent=51 // pred_check
          %p371 = pneg %p44
        $region54: #{tpu_custom_call.1} parent=51 // pred_check_branch
          %373 = sbr.rel (%p371) target = $region56
        $region55: #{tpu_custom_call.1} parent=51 // pred_region
          %p374 = scmp.lt.s32.totalorder %s24, 1
          %s375 = scalar_select %p374, %s24, 1
          %s376 = smul.addr %s375, 8
          %s377 = scalar_lea.vmem %s0, %s376
        $region56: #{tpu_custom_call.1} parent=51 // pred_fallthru
          _
      $region52: #{tpu_custom_call.1} parent=5 // pred_fallthru
        _
      %p378 = scmp.le.s32.totalorder 1, %s24
      %p379 = scmp.lt.s32.totalorder %s24, 3
      %p380 = pnand %p378, %p379
      %p381 = pneg %p380
      // Predicated region
      $region57: #{tpu_custom_call.1} parent=5 // pred_check
        _
      $region58: #{tpu_custom_call.1} parent=5 // pred_check_branch
        %383 = sbr.rel (%p380) target = $region60
      $region59: #{tpu_custom_call.1} parent=5 // pred_region
        %s384 = ssub.s32 %s24, 1
        // Predicated region
        $region61: #{tpu_custom_call.1} parent=59 // pred_check
          %p385 = pneg %p71
        $region62: #{tpu_custom_call.1} parent=59 // pred_check_branch
          %387 = sbr.rel (%p385) target = $region64
        $region63: #{tpu_custom_call.1} parent=59 // pred_region
          %388 = dma.done [#allocation3], 32
        $region64: #{tpu_custom_call.1} parent=59 // pred_fallthru
          _
        // Predicated region
        $region65: #{tpu_custom_call.1} parent=59 // pred_check
          %p389 = pneg %p92
        $region66: #{tpu_custom_call.1} parent=59 // pred_check_branch
          %391 = sbr.rel (%p389) target = $region68
        $region67: #{tpu_custom_call.1} parent=59 // pred_region
          %392 = dma.done [#allocation6], 16
        $region68: #{tpu_custom_call.1} parent=59 // pred_fallthru
          _
        // Predicated region
        $region69: #{tpu_custom_call.1} parent=59 // pred_check
          %p393 = pneg %p155
        $region70: #{tpu_custom_call.1} parent=59 // pred_check_branch
          %395 = sbr.rel (%p393) target = $region72
        $region71: #{tpu_custom_call.1} parent=59 // pred_region
          %396 = dma.done [#allocation6], 1024
        $region72: #{tpu_custom_call.1} parent=59 // pred_fallthru
          _
        // Predicated region
        $region73: #{tpu_custom_call.1} parent=59 // pred_check
          %p397 = pneg %p197
        $region74: #{tpu_custom_call.1} parent=59 // pred_check_branch
          %399 = sbr.rel (%p397) target = $region76
        $region75: #{tpu_custom_call.1} parent=59 // pred_region
          %400 = dma.done [#allocation9], 32
        $region76: #{tpu_custom_call.1} parent=59 // pred_fallthru
          _
        %p401 = scmp.lt.s32.totalorder %s29, 1
        %s402 = scalar_select %p401, %s29, 1
        %s403 = smul.addr %s402, 8
        %s404 = scalar_lea.vmem %s0, %s403
        %p405 = pneg %p50
        %p406 = pneg %p47
        %p407 = pneg %p71
        %p408 = pneg %p68
        %p409 = pneg %p92
        %p410 = pneg %p89
        %p411 = pneg %p113
        %p412 = pneg %p110
        %p413 = pneg %p134
        %p414 = pneg %p131
        %p415 = pneg %p155
        %p416 = pneg %p152
        %p417 = pneg %p176
        %p418 = pneg %p173
        %p419 = pneg %p197
        %p420 = pneg %p194
        %p421 = pneg %p218
        %p422 = pneg %p215
        %p423 = pneg %p239
        %p424 = pneg %p236
        %p425 = pneg %p265
        %p426 = pneg %p262
        %p427 = scmp.lt.s32.totalorder %s29, 1
        %s428 = scalar_select %p427, %s29, 1
        %s429 = smul.addr %s428, 8
        %s430 = scalar_lea.vmem %s10, %s429
        %p431 = pneg %p291
        %p432 = pneg %p288
        %s433 = sand.u32 %s278, 1
        %s434 = scalar_lea.sflag [#allocation4], %s433
        %s435 = sand.u32 %s278, 1
        %s436 = smul.addr %s435, 8
        %s437 = scalar_lea.vmem [#allocation10], %s436
        %p438 = scmp.lt.s32.totalorder %s29, 1
        %s439 = scalar_select %p438, %s29, 1
        %s440 = smul.addr %s439, 8
        %s441 = scalar_lea.vmem %s0, %s440
        %p442 = scmp.lt.s32.totalorder %s29, 1
        %s443 = scalar_select %p442, %s29, 1
        %s444 = smul.addr %s443, 8
        %s445 = scalar_lea.vmem %s10, %s444
        %v446 = vld [vmem:[%s441] sm:$0xff]
        %v447 = vld [vmem:[#allocation2] sm:$0x3]
        %v448 = vld [vmem:[#allocation5] sm:$0x1]
        %v450 = vlaneseq
        %v451 = vshrl.u32 %v450, 7
        %v452 = vsub.s32 0, %v451
        %v453 = vrot.slane %v448, %v452
        %vm455 = vcmask 15360
        %v457 = vsel %vm455, %v446, 0
        %vm459 = vcmask 1041408
        %v461 = vsel %vm459, %v447, 0
        %463 = vmatprep.subr.mxu0 0.0
        %464 = vmatpush1.msra.mxu0 %v461
        %465 = vmatprep.subr.mxu0 0.0
        %466 = vmatpush1.msra.mxu0 0.0
        %467 = vmatprep.subr.mxu0 0.0
        %468 = vmatpush1.msra.mxu0 0.0
        %469 = vmatprep.subr.mxu0 0.0
        %470 = vmatpush1.msra.mxu0 0.0
        %471 = vmatprep.subr.mxu0 0.0
        %472 = vmatpush1.msra.mxu0 0.0
        %473 = vmatprep.subr.mxu0 0.0
        %474 = vmatpush1.msra.mxu0 0.0
        %475 = vmatprep.subr.mxu0 0.0
        %476 = vmatpush1.msra.mxu0 0.0
        %477 = vmatprep.subr.mxu0 0.0
        %478 = vmatpush1.msra.mxu0 0.0
        %479 = vmatprep.subr.mxu0 0.0
        %480 = vmatpush1.msra.mxu0 0.0
        %481 = vmatprep.subr.mxu0 0.0
        %482 = vmatpush1.msra.mxu0 0.0
        %483 = vmatprep.subr.mxu0 0.0
        %484 = vmatpush1.msra.mxu0 0.0
        %485 = vmatprep.subr.mxu0 0.0
        %486 = vmatpush1.msra.mxu0 0.0
        %487 = vmatprep.subr.mxu0 0.0
        %488 = vmatpush1.msra.mxu0 0.0
        %489 = vmatprep.subr.mxu0 0.0
        %490 = vmatpush1.msra.mxu0 0.0
        %491 = vmatprep.subr.mxu0 0.0
        %492 = vmatpush1.msra.mxu0 0.0
        %493 = vmatprep.subr.mxu0 0.0
        %494 = vmatpush1.msra.mxu0 0.0
        %495 = vmatprep.subr.mxu0 0.0
        %496 = vmatpush1.msra.mxu0 0.0
        %497 = vmatprep.subr.mxu0 0.0
        %498 = vmatpush1.msra.mxu0 0.0
        %499 = vmatprep.subr.mxu0 0.0
        %500 = vmatpush1.msra.mxu0 0.0
        %501 = vmatprep.subr.mxu0 0.0
        %502 = vmatpush1.msra.mxu0 0.0
        %503 = vmatprep.subr.mxu0 0.0
        %504 = vmatpush1.msra.mxu0 0.0
        %505 = vmatprep.subr.mxu0 0.0
        %506 = vmatpush1.msra.mxu0 0.0
        %507 = vmatprep.subr.mxu0 0.0
        %508 = vmatpush1.msra.mxu0 0.0
        %509 = vmatprep.subr.mxu0 0.0
        %510 = vmatpush1.msra.mxu0 0.0
        %511 = vmatprep.subr.mxu0 0.0
        %512 = vmatpush1.msra.mxu0 0.0
        %513 = vmatprep.subr.mxu0 0.0
        %514 = vmatpush1.msra.mxu0 0.0
        %515 = vmatprep.subr.mxu0 0.0
        %516 = vmatpush1.msra.mxu0 0.0
        %517 = vmatprep.subr.mxu0 0.0
        %518 = vmatpush1.msra.mxu0 0.0
        %519 = vmatprep.subr.mxu0 0.0
        %520 = vmatpush1.msra.mxu0 0.0
        %521 = vmatprep.subr.mxu0 0.0
        %522 = vmatpush1.msra.mxu0 0.0
        %523 = vmatprep.subr.mxu0 0.0
        %524 = vmatpush1.msra.mxu0 0.0
        %525 = vmatprep.subr.mxu0 0.0
        %526 = vmatpush1.msra.mxu0 0.0
        %527 = vmatprep.mubr.f32.mxu0 0.0
        %528 = vmatmul.mubr.f32.gmra.mrb[0].mxu0 %v457
        %v529 = vpop.f32.mrb[0].mxu0
        %v530 = vadd.f32 %v453, %v529
        %v531 = vpop.f32.mrb[0].mxu0
        %532 = vdwg.mxu0
        %v533 = vlaneseq
        %v534 = vand.u32 %v533, 127
        %vm535 = vcmp.lt.s32.totalorder %v534, 2
        %v536 = vand.u32 2147483647, %v530
        %vm537 = vcmp.le.f32.partialorder %v536, 0.7853982
        %vm538 = vcmp.lt.s32.totalorder %v530, 0
        %v539 = vand.u32 %v530, 2139095040
        %v540 = vshrl.u32 %v539, 23
        %v541 = vsub.s32 %v540, 127
        %v542 = vand.u32 2147483647, %v530
        %v543 = vand.u32 %v542, 8388607
        %v544 = vor.u32 %v543, 8388608
        %v545 = vsub.s32 0, %v544
        %v546 = vadd.s32 %v541, 1
        %vm547 = vcmp.gt.s32.totalorder %v546, 0
        %v548 = vsel %vm547, %v546, 0
        %v549 = vshrl.u32 %v548, 5
        %v550 = vand.u32 %v548, 31
        %v551 = vsub.s32 32, %v550
        %v552 = vshrl.u32 683565275, %v551
        %v553 = vshll.u32 683565275, %v550
        %v554 = vshrl.u32 2475754826, %v551
        %v555 = vor.u32 %v553, %v554
        %v556 = vshll.u32 2475754826, %v550
        %v557 = vshrl.u32 2131351028, %v551
        %v558 = vor.u32 %v556, %v557
        %v559 = vshll.u32 2131351028, %v550
        %v560 = vshrl.u32 2102212464, %v551
        %v561 = vor.u32 %v559, %v560
        %v562 = vshll.u32 2102212464, %v550
        %v563 = vshrl.u32 920167782, %v551
        %v564 = vor.u32 %v562, %v563
        %v565 = vshll.u32 920167782, %v550
        %v566 = vshrl.u32 1326507024, %v551
        %v567 = vor.u32 %v565, %v566
        %vm568 = vcmp.lt.s32.totalorder %v549, 1
        %vm569 = vcmp.lt.s32.totalorder %v549, 2
        %vm570 = vcmp.lt.s32.totalorder %v549, 3
        %vm571 = vcmp.lt.s32.totalorder %v549, 4
        %v572 = vsel %vm568, %v552, %v555
        %v573 = vsel %vm571, %v561, 2102212464
        %v574 = vsel %vm570, %v558, %v573
        %v575 = vsel %vm569, %v572, %v574
        %v576 = vsel %vm568, %v555, %v558
        %v577 = vsel %vm571, %v564, 920167782
        %v578 = vsel %vm570, %v561, %v577
        %v579 = vsel %vm569, %v576, %v578
        %v580 = vsel %vm568, %v558, %v561
        %v581 = vsel %vm571, %v567, 1326507024
        %v582 = vsel %vm570, %v564, %v581
        %v583 = vsel %vm569, %v580, %v582
        %v584 = vshll.u32 %v544, 8
        %v585 = vmul.u32.u64.compose %v584, %v583
        %v586 = vextract.low.u32 %v585
        %v587 = vextract.high.u32 %v585
        %v588 = vmul.u32.u64.compose %v584, %v579
        %v589 = vextract.low.u32 %v588
        %v590 = vextract.high.u32 %v588
        %v591 = vmul.u32 %v584, %v575
        %v592 = vadd.s32 %v587, %v589
        %vm593 = vc.u32 %v587, %v589
        %v594 = vadd.s32 %v590, 1
        %v595 = vsel %vm593, %v594, %v590
        %v596 = vadd.s32 %v591, %v595
        %v597 = vadd.s32 %v596, 536870912
        %v598 = vshrl.u32 %v597, 30
        %v599 = vshll.u32 %v598, 30
        %v600 = vsub.s32 %v596, %v599
        %vm601 = vcmp.lt.s32.totalorder %v600, 0
        %v602 = vsub.s32 0, %v600
        %v603 = vsel %vm601, %v602, %v600
        %v604 = vclz %v603
        %v605 = vsub.s32 %v604, 2
        %vm606 = vcmp.gt.s32.totalorder 0, %v605
        %v607 = vsel %vm606, 0, %v605
        %v608 = vsub.s32 32, %v607
        %v609 = vshll.u32 %v600, %v607
        %v610 = vshrl.u32 %v592, %v608
        %v611 = vor.u32 %v609, %v610
        %v612 = vsub.s32 4294967266, %v607
        %v613 = vadd.s32 %v612, 127
        %v614 = vshll.u32 %v613, 23
        %v615 = vor.u32 4788187, %v614
        %v616 = vand.u32 2147483647, %v615
        %v618 = vcvt.s32.f32 %v611
        %v619 = vmul.f32 %v618, %v616
        %v620 = vxor.u32 %v619, 2147483648
        %v621 = vsel %vm538, %v620, %v619
        %v622 = vsub.s32 4, %v598
        %v623 = vsel %vm538, %v622, %v598
        %v624 = vsel %vm537, %v530, %v621
        %v625 = vsel %vm537, 0, %v623
        %v626 = vcosq.f32.pop %v624
        %v627 = vsinq.f32.pop %v624
        %vm628 = vweird.f32 %v530
        %v629 = vadd.s32 %v625, 3
        %v630 = vand.u32 %v629, 3
        %vm631 = vcmp.lt.s32.totalorder %v630, 2
        %vm632 = vcmp.eq.s32.totalorder %v630, 0
        %v633 = vxor.u32 %v627, 2147483648
        %v634 = vsel %vm632, %v626, %v633
        %vm635 = vcmp.eq.s32.totalorder %v630, 2
        %v636 = vxor.u32 %v626, 2147483648
        %v637 = vsel %vm635, %v636, %v627
        %v638 = vsel %vm631, %v634, %v637
        %v639 = vsel %vm628, nan, %v638
        %v640 = vsel %vm535, %v530, %v639
        %v641 = vld [vmem:[%s4] sm:$0xff]
        %v642 = vld [vmem:[%s3] sm:$0xff]
        %v643 = vld [vmem:[%s3 + $0x8] sm:$0xff]
        %v644 = vld [vmem:[%s3 + $0x10] sm:$0xff]
        %v645 = vld [vmem:[%s3 + $0x18] sm:$0xff]
        %v646 = vlaneseq
        %v647 = vshrl.u32 %v646, 7
        %v648 = vsub.s32 0, %v647
        %v649 = vrot.slane %v641, %v648
        %vm650 = vcmask 261120
        %v652 = vsel %vm650, %v640, 0
        %654 = vmatprep.subr.mxu0 0.0
        %655 = vmatpush1.msra.mxu0 %v642
        %656 = vmatprep.subr.mxu0 0.0
        %657 = vmatpush1.msra.mxu0 %v643
        %658 = vmatprep.subr.mxu0 0.0
        %659 = vmatpush1.msra.mxu0 %v644
        %660 = vmatprep.subr.mxu0 0.0
        %661 = vmatpush1.msra.mxu0 %v645
        %662 = vmatprep.subr.mxu0 0.0
        %663 = vmatpush1.msra.mxu0 0.0
        %664 = vmatprep.subr.mxu0 0.0
        %665 = vmatpush1.msra.mxu0 0.0
        %666 = vmatprep.subr.mxu0 0.0
        %667 = vmatpush1.msra.mxu0 0.0
        %668 = vmatprep.subr.mxu0 0.0
        %669 = vmatpush1.msra.mxu0 0.0
        %670 = vmatprep.subr.mxu0 0.0
        %671 = vmatpush1.msra.mxu0 0.0
        %672 = vmatprep.subr.mxu0 0.0
        %673 = vmatpush1.msra.mxu0 0.0
        %674 = vmatprep.subr.mxu0 0.0
        %675 = vmatpush1.msra.mxu0 0.0
        %676 = vmatprep.subr.mxu0 0.0
        %677 = vmatpush1.msra.mxu0 0.0
        %678 = vmatprep.subr.mxu0 0.0
        %679 = vmatpush1.msra.mxu0 0.0
        %680 = vmatprep.subr.mxu0 0.0
        %681 = vmatpush1.msra.mxu0 0.0
        %682 = vmatprep.subr.mxu0 0.0
        %683 = vmatpush1.msra.mxu0 0.0
        %684 = vmatprep.subr.mxu0 0.0
        %685 = vmatpush1.msra.mxu0 0.0
        %686 = vmatprep.subr.mxu0 0.0
        %687 = vmatpush1.msra.mxu0 0.0
        %688 = vmatprep.subr.mxu0 0.0
        %689 = vmatpush1.msra.mxu0 0.0
        %690 = vmatprep.subr.mxu0 0.0
        %691 = vmatpush1.msra.mxu0 0.0
        %692 = vmatprep.subr.mxu0 0.0
        %693 = vmatpush1.msra.mxu0 0.0
        %694 = vmatprep.subr.mxu0 0.0
        %695 = vmatpush1.msra.mxu0 0.0
        %696 = vmatprep.subr.mxu0 0.0
        %697 = vmatpush1.msra.mxu0 0.0
        %698 = vmatprep.subr.mxu0 0.0
        %699 = vmatpush1.msra.mxu0 0.0
        %700 = vmatprep.subr.mxu0 0.0
        %701 = vmatpush1.msra.mxu0 0.0
        %702 = vmatprep.subr.mxu0 0.0
        %703 = vmatpush1.msra.mxu0 0.0
        %704 = vmatprep.subr.mxu0 0.0
        %705 = vmatpush1.msra.mxu0 0.0
        %706 = vmatprep.subr.mxu0 0.0
        %707 = vmatpush1.msra.mxu0 0.0
        %708 = vmatprep.subr.mxu0 0.0
        %709 = vmatpush1.msra.mxu0 0.0
        %710 = vmatprep.subr.mxu0 0.0
        %711 = vmatpush1.msra.mxu0 0.0
        %712 = vmatprep.subr.mxu0 0.0
        %713 = vmatpush1.msra.mxu0 0.0
        %714 = vmatprep.subr.mxu0 0.0
        %715 = vmatpush1.msra.mxu0 0.0
        %716 = vmatprep.subr.mxu0 0.0
        %717 = vmatpush1.msra.mxu0 0.0
        %718 = vmatprep.mubr.f32.mxu0 0.0
        %719 = vmatmul.mubr.f32.gmra.mrb[0].mxu0 %v652
        %v720 = vpop.f32.mrb[0].mxu0
        %v721 = vadd.f32 %v649, %v720
        %v722 = vpop.f32.mrb[0].mxu0
        %723 = vdwg.mxu0
        %vm724 = vcmask 523264
        %v725 = vsel %vm724, %v721, 0.0
        %726 = vadd.xlane.f32.xlu0 %v725
        %v727 = vpop.xlane.xlu0 %726
        %v728 = vrcp.pop 64.0
        %v729 = vmul.f32 %v727, %v728
        %v730 = vmul.f32 %v721, %v721
        %v731 = vsel %vm724, %v730, 0.0
        %732 = vadd.xlane.f32.xlu0 %v731
        %v733 = vpop.xlane.xlu0 %732
        %v734 = vmul.f32 %v733, %v728
        %v735 = vmul.f32 %v729, %v729
        %v736 = vsub.f32 %v734, %v735
        %v737 = vmax.f32 %v736, 0.0
        %v738 = vsub.f32 %v721, %v729
        %v739 = vadd.f32 %v737, 1e-05
        %v740 = vrsqrt.pop %v739
        %v741 = vmul.f32 %v738, %v740
        %v742 = vlaneseq
        %v743 = vshrl.u32 %v742, 7
        %v744 = vsub.s32 1, %v743
        %v745 = vrot.slane %v641, %v744
        %v746 = vmul.f32 %v741, %v745
        %v747 = vlaneseq
        %v748 = vshrl.u32 %v747, 7
        %v749 = vsub.s32 2, %v748
        %v750 = vrot.slane %v641, %v749
        %v751 = vadd.f32 %v746, %v750
        %v752 = vxor.u32 %v751, 2147483648
        %v753 = vmul.f32 %v752, 1.442695
        %v754 = vpow.pop %v753
        %v755 = vadd.f32 %v754, 1.0
        %v756 = vrcp.pop %v755
        %v757 = vmul.f32 1.0, %v756
        %v758 = vmul.f32 %v751, %v757
        %v759 = vld [vmem:[#allocation7] sm:$0xff]
        %v760 = vld [vmem:[#allocation7 + $0x8] sm:$0xff]
        %v761 = vld [vmem:[#allocation7 + $0x10] sm:$0xff]
        %v762 = vld [vmem:[#allocation7 + $0x18] sm:$0xff]
        %v763 = vld [vmem:[#allocation7 + $0x20] sm:$0xff]
        %v764 = vld [vmem:[#allocation7 + $0x28] sm:$0xff]
        %v765 = vld [vmem:[#allocation7 + $0x30] sm:$0xff]
        %v766 = vld [vmem:[#allocation7 + $0x38] sm:$0xff]
        %v767 = vlaneseq
        %v768 = vshrl.u32 %v767, 7
        %v769 = vsub.s32 3, %v768
        %v770 = vrot.slane %v641, %v769
        %v772 = vsel %vm724, %v758, 0
        %774 = vmatprep.subr.mxu0 0.0
        %775 = vmatpush1.msra.mxu0 %v759
        %776 = vmatprep.subr.mxu0 0.0
        %777 = vmatpush1.msra.mxu0 %v760
        %778 = vmatprep.subr.mxu0 0.0
        %779 = vmatpush1.msra.mxu0 %v761
        %780 = vmatprep.subr.mxu0 0.0
        %781 = vmatpush1.msra.mxu0 %v762
        %782 = vmatprep.subr.mxu0 0.0
        %783 = vmatpush1.msra.mxu0 %v763
        %784 = vmatprep.subr.mxu0 0.0
        %785 = vmatpush1.msra.mxu0 %v764
        %786 = vmatprep.subr.mxu0 0.0
        %787 = vmatpush1.msra.mxu0 %v765
        %788 = vmatprep.subr.mxu0 0.0
        %789 = vmatpush1.msra.mxu0 %v766
        %790 = vmatprep.subr.mxu0 0.0
        %791 = vmatpush1.msra.mxu0 0.0
        %792 = vmatprep.subr.mxu0 0.0
        %793 = vmatpush1.msra.mxu0 0.0
        %794 = vmatprep.subr.mxu0 0.0
        %795 = vmatpush1.msra.mxu0 0.0
        %796 = vmatprep.subr.mxu0 0.0
        %797 = vmatpush1.msra.mxu0 0.0
        %798 = vmatprep.subr.mxu0 0.0
        %799 = vmatpush1.msra.mxu0 0.0
        %800 = vmatprep.subr.mxu0 0.0
        %801 = vmatpush1.msra.mxu0 0.0
        %802 = vmatprep.subr.mxu0 0.0
        %803 = vmatpush1.msra.mxu0 0.0
        %804 = vmatprep.subr.mxu0 0.0
        %805 = vmatpush1.msra.mxu0 0.0
        %806 = vmatprep.subr.mxu0 0.0
        %807 = vmatpush1.msra.mxu0 0.0
        %808 = vmatprep.subr.mxu0 0.0
        %809 = vmatpush1.msra.mxu0 0.0
        %810 = vmatprep.subr.mxu0 0.0
        %811 = vmatpush1.msra.mxu0 0.0
        %812 = vmatprep.subr.mxu0 0.0
        %813 = vmatpush1.msra.mxu0 0.0
        %814 = vmatprep.subr.mxu0 0.0
        %815 = vmatpush1.msra.mxu0 0.0
        %816 = vmatprep.subr.mxu0 0.0
        %817 = vmatpush1.msra.mxu0 0.0
        %818 = vmatprep.subr.mxu0 0.0
        %819 = vmatpush1.msra.mxu0 0.0
        %820 = vmatprep.subr.mxu0 0.0
        %821 = vmatpush1.msra.mxu0 0.0
        %822 = vmatprep.subr.mxu0 0.0
        %823 = vmatpush1.msra.mxu0 0.0
        %824 = vmatprep.subr.mxu0 0.0
        %825 = vmatpush1.msra.mxu0 0.0
        %826 = vmatprep.subr.mxu0 0.0
        %827 = vmatpush1.msra.mxu0 0.0
        %828 = vmatprep.subr.mxu0 0.0
        %829 = vmatpush1.msra.mxu0 0.0
        %830 = vmatprep.subr.mxu0 0.0
        %831 = vmatpush1.msra.mxu0 0.0
        %832 = vmatprep.subr.mxu0 0.0
        %833 = vmatpush1.msra.mxu0 0.0
        %834 = vmatprep.subr.mxu0 0.0
        %835 = vmatpush1.msra.mxu0 0.0
        %836 = vmatprep.subr.mxu0 0.0
        %837 = vmatpush1.msra.mxu0 0.0
        %838 = vmatprep.mubr.f32.mxu0 0.0
        %839 = vmatmul.mubr.f32.gmra.mrb[0].mxu0 %v772
        %v840 = vpop.f32.mrb[0].mxu0
        %v841 = vadd.f32 %v770, %v840
        %v842 = vpop.f32.mrb[0].mxu0
        %843 = vdwg.mxu0
        %v844 = vsel %vm724, %v841, 0.0
        %845 = vadd.xlane.f32.xlu0 %v844
        %v846 = vpop.xlane.xlu0 %845
        %v847 = vmul.f32 %v846, %v728
        %v848 = vmul.f32 %v841, %v841
        %v849 = vsel %vm724, %v848, 0.0
        %850 = vadd.xlane.f32.xlu0 %v849
        %v851 = vpop.xlane.xlu0 %850
        %v852 = vmul.f32 %v851, %v728
        %v853 = vmul.f32 %v847, %v847
        %v854 = vsub.f32 %v852, %v853
        %v855 = vmax.f32 %v854, 0.0
        %v856 = vsub.f32 %v841, %v847
        %v857 = vadd.f32 %v855, 1e-05
        %v858 = vrsqrt.pop %v857
        %v859 = vmul.f32 %v856, %v858
        %v860 = vlaneseq
        %v861 = vshrl.u32 %v860, 7
        %v862 = vsub.s32 4, %v861
        %v863 = vrot.slane %v641, %v862
        %v864 = vmul.f32 %v859, %v863
        %v865 = vlaneseq
        %v866 = vshrl.u32 %v865, 7
        %v867 = vsub.s32 5, %v866
        %v868 = vrot.slane %v641, %v867
        %v869 = vadd.f32 %v864, %v868
        %v870 = vxor.u32 %v869, 2147483648
        %v871 = vmul.f32 %v870, 1.442695
        %v872 = vpow.pop %v871
        %v873 = vadd.f32 %v872, 1.0
        %v874 = vrcp.pop %v873
        %v875 = vmul.f32 1.0, %v874
        %v876 = vmul.f32 %v869, %v875
        %v877 = vld [vmem:[%s6] sm:$0xff]
        %v878 = vld [vmem:[%s6 + $0x8] sm:$0xff]
        %v879 = vld [vmem:[%s6 + $0x10] sm:$0xff]
        %v880 = vld [vmem:[%s6 + $0x18] sm:$0xff]
        %v881 = vld [vmem:[%s6 + $0x20] sm:$0xff]
        %v882 = vld [vmem:[%s6 + $0x28] sm:$0xff]
        %v883 = vld [vmem:[%s6 + $0x30] sm:$0xff]
        %v884 = vld [vmem:[%s6 + $0x38] sm:$0xff]
        %v885 = vld [vmem:[%s6 + $0x40] sm:$0xff]
        %v886 = vld [vmem:[%s6 + $0x48] sm:$0xff]
        %v887 = vld [vmem:[%s6 + $0x50] sm:$0xff]
        %v888 = vld [vmem:[%s6 + $0x58] sm:$0xff]
        %v889 = vld [vmem:[%s6 + $0x60] sm:$0xff]
        %v890 = vld [vmem:[%s6 + $0x68] sm:$0xff]
        %v891 = vld [vmem:[%s6 + $0x70] sm:$0xff]
        %v892 = vld [vmem:[%s6 + $0x78] sm:$0xff]
        %v893 = vld [vmem:[#allocation8] sm:$0x3]
        %v895 = vlaneseq
        %v896 = vshrl.u32 %v895, 7
        %v897 = vsub.s32 0, %v896
        %v898 = vrot.slane %v893, %v897
        %v899 = vlaneseq
        %v900 = vshrl.u32 %v899, 7
        %v901 = vsub.s32 1, %v900
        %v902 = vrot.slane %v893, %v901
        %v906 = vsel %vm724, %v876, 0
        %908 = vmatprep.subr.mxu0 %v878
        %909 = vmatpush1.msra.mxu0 %v877
        %910 = vmatprep.subr.mxu0 %v880
        %911 = vmatpush1.msra.mxu0 %v879
        %912 = vmatprep.subr.mxu0 %v882
        %913 = vmatpush1.msra.mxu0 %v881
        %914 = vmatprep.subr.mxu0 %v884
        %915 = vmatpush1.msra.mxu0 %v883
        %916 = vmatprep.subr.mxu0 %v886
        %917 = vmatpush1.msra.mxu0 %v885
        %918 = vmatprep.subr.mxu0 %v888
        %919 = vmatpush1.msra.mxu0 %v887
        %920 = vmatprep.subr.mxu0 %v890
        %921 = vmatpush1.msra.mxu0 %v889
        %922 = vmatprep.subr.mxu0 %v892
        %923 = vmatpush1.msra.mxu0 %v891
        %924 = vmatprep.subr.mxu0 0.0
        %925 = vmatpush1.msra.mxu0 0.0
        %926 = vmatprep.subr.mxu0 0.0
        %927 = vmatpush1.msra.mxu0 0.0
        %928 = vmatprep.subr.mxu0 0.0
        %929 = vmatpush1.msra.mxu0 0.0
        %930 = vmatprep.subr.mxu0 0.0
        %931 = vmatpush1.msra.mxu0 0.0
        %932 = vmatprep.subr.mxu0 0.0
        %933 = vmatpush1.msra.mxu0 0.0
        %934 = vmatprep.subr.mxu0 0.0
        %935 = vmatpush1.msra.mxu0 0.0
        %936 = vmatprep.subr.mxu0 0.0
        %937 = vmatpush1.msra.mxu0 0.0
        %938 = vmatprep.subr.mxu0 0.0
        %939 = vmatpush1.msra.mxu0 0.0
        %940 = vmatprep.subr.mxu0 0.0
        %941 = vmatpush1.msra.mxu0 0.0
        %942 = vmatprep.subr.mxu0 0.0
        %943 = vmatpush1.msra.mxu0 0.0
        %944 = vmatprep.subr.mxu0 0.0
        %945 = vmatpush1.msra.mxu0 0.0
        %946 = vmatprep.subr.mxu0 0.0
        %947 = vmatpush1.msra.mxu0 0.0
        %948 = vmatprep.subr.mxu0 0.0
        %949 = vmatpush1.msra.mxu0 0.0
        %950 = vmatprep.subr.mxu0 0.0
        %951 = vmatpush1.msra.mxu0 0.0
        %952 = vmatprep.subr.mxu0 0.0
        %953 = vmatpush1.msra.mxu0 0.0
        %954 = vmatprep.subr.mxu0 0.0
        %955 = vmatpush1.msra.mxu0 0.0
        %956 = vmatprep.subr.mxu0 0.0
        %957 = vmatpush1.msra.mxu0 0.0
        %958 = vmatprep.subr.mxu0 0.0
        %959 = vmatpush1.msra.mxu0 0.0
        %960 = vmatprep.subr.mxu0 0.0
        %961 = vmatpush1.msra.mxu0 0.0
        %962 = vmatprep.subr.mxu0 0.0
        %963 = vmatpush1.msra.mxu0 0.0
        %964 = vmatprep.subr.mxu0 0.0
        %965 = vmatpush1.msra.mxu0 0.0
        %966 = vmatprep.subr.mxu0 0.0
        %967 = vmatpush1.msra.mxu0 0.0
        %968 = vmatprep.subr.mxu0 0.0
        %969 = vmatpush1.msra.mxu0 0.0
        %970 = vmatprep.subr.mxu0 0.0
        %971 = vmatpush1.msra.mxu0 0.0
        %972 = vmatprep.mubr.f32.mxu0 0.0
        %973 = vmatmul.mubr.f32.gmra.mrb[0].mxu0 %v906
        %v974 = vpop.f32.mrb[0].mxu0
        %v975 = vadd.f32 %v898, %v974
        %v976 = vpop.f32.mrb[0].mxu0
        %v977 = vadd.f32 %v902, %v976
        %978 = vdwg.mxu0
        %vm979 = vcmask 31744
        %980 = vst.msk [vmem:[%s445] sm:$0xff] %vm979, %v977
        %981 = vmax.xlane.f32.xlu0 %v975
        %v982 = vpop.xlane.xlu0 %981
        %v983 = vsub.f32 %v975, %v982
        %v984 = vmul.f32 %v983, 1.442695
        %v985 = vpow.pop %v984
        %v986 = vld [vmem:[%s8] sm:$0xff]
        %v987 = vld [vmem:[%s8 + $0x8] sm:$0xff]
        %v988 = vld [vmem:[%s8 + $0x10] sm:$0xff]
        %v989 = vld [vmem:[%s8 + $0x18] sm:$0xff]
        %v990 = vld [vmem:[%s8 + $0x20] sm:$0xff]
        %v991 = vld [vmem:[%s8 + $0x28] sm:$0xff]
        %v992 = vld [vmem:[%s8 + $0x30] sm:$0xff]
        %v993 = vld [vmem:[%s8 + $0x38] sm:$0xff]
        %v994 = vld [vmem:[%s8 + $0x40] sm:$0xff]
        %v995 = vld [vmem:[%s8 + $0x48] sm:$0xff]
        %v996 = vld [vmem:[%s8 + $0x50] sm:$0xff]
        %v997 = vld [vmem:[%s8 + $0x58] sm:$0xff]
        %v998 = vld [vmem:[%s8 + $0x60] sm:$0xff]
        %v999 = vld [vmem:[%s8 + $0x68] sm:$0xff]
        %v1000 = vld [vmem:[%s8 + $0x70] sm:$0xff]
        %v1001 = vld [vmem:[%s8 + $0x78] sm:$0xff]
        %1002 = vmatprep.subr.mxu0 0.0
        %1003 = vmatpush1.msra.mxu0 %v986
        %1004 = vmatprep.subr.mxu0 0.0
        %1005 = vmatpush1.msra.mxu0 %v987
        %1006 = vmatprep.subr.mxu0 0.0
        %1007 = vmatpush1.msra.mxu0 %v988
        %1008 = vmatprep.subr.mxu0 0.0
        %1009 = vmatpush1.msra.mxu0 %v989
        %1010 = vmatprep.subr.mxu0 0.0
        %1011 = vmatpush1.msra.mxu0 %v990
        %1012 = vmatprep.subr.mxu0 0.0
        %1013 = vmatpush1.msra.mxu0 %v991
        %1014 = vmatprep.subr.mxu0 0.0
        %1015 = vmatpush1.msra.mxu0 %v992
        %1016 = vmatprep.subr.mxu0 0.0
        %1017 = vmatpush1.msra.mxu0 %v993
        %1018 = vmatprep.subr.mxu0 0.0
        %1019 = vmatpush1.msra.mxu0 %v994
        %1020 = vmatprep.subr.mxu0 0.0
        %1021 = vmatpush1.msra.mxu0 %v995
        %1022 = vmatprep.subr.mxu0 0.0
        %1023 = vmatpush1.msra.mxu0 %v996
        %1024 = vmatprep.subr.mxu0 0.0
        %1025 = vmatpush1.msra.mxu0 %v997
        %1026 = vmatprep.subr.mxu0 0.0
        %1027 = vmatpush1.msra.mxu0 %v998
        %1028 = vmatprep.subr.mxu0 0.0
        %1029 = vmatpush1.msra.mxu0 %v999
        %1030 = vmatprep.subr.mxu0 0.0
        %1031 = vmatpush1.msra.mxu0 %v1000
        %1032 = vmatprep.subr.mxu0 0.0
        %1033 = vmatpush1.msra.mxu0 %v1001
        %1034 = vmatprep.subr.mxu0 0.0
        %1035 = vmatpush1.msra.mxu0 0.0
        %1036 = vmatprep.subr.mxu0 0.0
        %1037 = vmatpush1.msra.mxu0 0.0
        %1038 = vmatprep.subr.mxu0 0.0
        %1039 = vmatpush1.msra.mxu0 0.0
        %1040 = vmatprep.subr.mxu0 0.0
        %1041 = vmatpush1.msra.mxu0 0.0
        %1042 = vmatprep.subr.mxu0 0.0
        %1043 = vmatpush1.msra.mxu0 0.0
        %1044 = vmatprep.subr.mxu0 0.0
        %1045 = vmatpush1.msra.mxu0 0.0
        %1046 = vmatprep.subr.mxu0 0.0
        %1047 = vmatpush1.msra.mxu0 0.0
        %1048 = vmatprep.subr.mxu0 0.0
        %1049 = vmatpush1.msra.mxu0 0.0
        %1050 = vmatprep.subr.mxu0 0.0
        %1051 = vmatpush1.msra.mxu0 0.0
        %1052 = vmatprep.subr.mxu0 0.0
        %1053 = vmatpush1.msra.mxu0 0.0
        %1054 = vmatprep.subr.mxu0 0.0
        %1055 = vmatpush1.msra.mxu0 0.0
        %1056 = vmatprep.subr.mxu0 0.0
        %1057 = vmatpush1.msra.mxu0 0.0
        %1058 = vmatprep.subr.mxu0 0.0
        %1059 = vmatpush1.msra.mxu0 0.0
        %1060 = vmatprep.subr.mxu0 0.0
        %1061 = vmatpush1.msra.mxu0 0.0
        %1062 = vmatprep.subr.mxu0 0.0
        %1063 = vmatpush1.msra.mxu0 0.0
        %1064 = vmatprep.subr.mxu0 0.0
        %1065 = vmatpush1.msra.mxu0 0.0
        %1066 = vmatprep.mubr.f32.mxu0 0.0
        %1067 = vmatmul.mubr.f32.gmra.mrb[0].mxu0 %v985
        %v1068 = vpop.f32.mrb[0].mxu0
        %v1069 = vadd.f32 0.0, %v1068
        %v1070 = vpop.f32.mrb[0].mxu0
        %1071 = vdwg.mxu0
        %v1072 = vmax.f32 %v1069, 1e-30
        %v1073 = vrcp.pop %v1072
        %v1074 = vld [vmem:[%s9] sm:$0xf]
        %v1076 = vsel %vm979, %v1073, 0
        %vm1078 = vcmask 1043456
        %v1080 = vsel %vm1078, %v1074, 0
        %1082 = vmatprep.subr.mxu0 0.0
        %1083 = vmatpush1.msra.mxu0 %v1080
        %1084 = vmatprep.subr.mxu0 0.0
        %1085 = vmatpush1.msra.mxu0 0.0
        %1086 = vmatprep.subr.mxu0 0.0
        %1087 = vmatpush1.msra.mxu0 0.0
        %1088 = vmatprep.subr.mxu0 0.0
        %1089 = vmatpush1.msra.mxu0 0.0
        %1090 = vmatprep.subr.mxu0 0.0
        %1091 = vmatpush1.msra.mxu0 0.0
        %1092 = vmatprep.subr.mxu0 0.0
        %1093 = vmatpush1.msra.mxu0 0.0
        %1094 = vmatprep.subr.mxu0 0.0
        %1095 = vmatpush1.msra.mxu0 0.0
        %1096 = vmatprep.subr.mxu0 0.0
        %1097 = vmatpush1.msra.mxu0 0.0
        %1098 = vmatprep.subr.mxu0 0.0
        %1099 = vmatpush1.msra.mxu0 0.0
        %1100 = vmatprep.subr.mxu0 0.0
        %1101 = vmatpush1.msra.mxu0 0.0
        %1102 = vmatprep.subr.mxu0 0.0
        %1103 = vmatpush1.msra.mxu0 0.0
        %1104 = vmatprep.subr.mxu0 0.0
        %1105 = vmatpush1.msra.mxu0 0.0
        %1106 = vmatprep.subr.mxu0 0.0
        %1107 = vmatpush1.msra.mxu0 0.0
        %1108 = vmatprep.subr.mxu0 0.0
        %1109 = vmatpush1.msra.mxu0 0.0
        %1110 = vmatprep.subr.mxu0 0.0
        %1111 = vmatpush1.msra.mxu0 0.0
        %1112 = vmatprep.subr.mxu0 0.0
        %1113 = vmatpush1.msra.mxu0 0.0
        %1114 = vmatprep.subr.mxu0 0.0
        %1115 = vmatpush1.msra.mxu0 0.0
        %1116 = vmatprep.subr.mxu0 0.0
        %1117 = vmatpush1.msra.mxu0 0.0
        %1118 = vmatprep.subr.mxu0 0.0
        %1119 = vmatpush1.msra.mxu0 0.0
        %1120 = vmatprep.subr.mxu0 0.0
        %1121 = vmatpush1.msra.mxu0 0.0
        %1122 = vmatprep.subr.mxu0 0.0
        %1123 = vmatpush1.msra.mxu0 0.0
        %1124 = vmatprep.subr.mxu0 0.0
        %1125 = vmatpush1.msra.mxu0 0.0
        %1126 = vmatprep.subr.mxu0 0.0
        %1127 = vmatpush1.msra.mxu0 0.0
        %1128 = vmatprep.subr.mxu0 0.0
        %1129 = vmatpush1.msra.mxu0 0.0
        %1130 = vmatprep.subr.mxu0 0.0
        %1131 = vmatpush1.msra.mxu0 0.0
        %1132 = vmatprep.subr.mxu0 0.0
        %1133 = vmatpush1.msra.mxu0 0.0
        %1134 = vmatprep.subr.mxu0 0.0
        %1135 = vmatpush1.msra.mxu0 0.0
        %1136 = vmatprep.subr.mxu0 0.0
        %1137 = vmatpush1.msra.mxu0 0.0
        %1138 = vmatprep.subr.mxu0 0.0
        %1139 = vmatpush1.msra.mxu0 0.0
        %1140 = vmatprep.subr.mxu0 0.0
        %1141 = vmatpush1.msra.mxu0 0.0
        %1142 = vmatprep.subr.mxu0 0.0
        %1143 = vmatpush1.msra.mxu0 0.0
        %1144 = vmatprep.subr.mxu0 0.0
        %1145 = vmatpush1.msra.mxu0 0.0
        %1146 = vmatprep.mubr.f32.mxu0 0.0
        %1147 = vmatmul.mubr.f32.gmra.mrb[0].mxu0 %v1076
        %v1148 = vpop.f32.mrb[0].mxu0
        %v1149 = vadd.f32 0.0, %v1148
        %v1150 = vpop.f32.mrb[0].mxu0
        %1151 = vdwg.mxu0
        %v1152 = vmul.f32 %v985, %v1149
        %1153 = vst [vmem:[%s437] sm:$0xff] %v1152
        %p1154 = scmp.lt.s32.totalorder %s29, 1
        %s1155 = scalar_select %p1154, %s29, 1
        %s1156 = smul.addr %s1155, 8
        %s1157 = scalar_lea.vmem %s10, %s1156
        %s1158 = sand.u32 %s278, 1
        %s1159 = scalar_lea.sflag [#allocation4], %s1158
        %s1160 = sand.u32 %s278, 1
        %s1161 = smul.addr %s1160, 8
        %s1162 = scalar_lea.vmem [#allocation10], %s1161
        // Predicated region
        $region77: #{tpu_custom_call.1} parent=59 // pred_check
          %p1163 = pneg %p262
        $region78: #{tpu_custom_call.1} parent=59 // pred_check_branch
          %1165 = sbr.rel (%p1163) target = $region80
        $region79: #{tpu_custom_call.1} parent=59 // pred_region
          _
        $region80: #{tpu_custom_call.1} parent=59 // pred_fallthru
          _
        // Predicated region
        $region81: #{tpu_custom_call.1} parent=59 // pred_check
          %p1166 = pneg %p288
        $region82: #{tpu_custom_call.1} parent=59 // pred_check_branch
          %1168 = sbr.rel (%p1166) target = $region84
        $region83: #{tpu_custom_call.1} parent=59 // pred_region
          %s1170 = ssub.s32 128, 128
          %1171 = vsyncadd %s1159, %s1170
          %s1172 = smul.addr %s29, 128
          %s1173 = scalar_lea.hbm %s11, %s1172
          %s1175 = sshll.u32 %s1162, 4
          %s1176 = int_to_ptr.vmem [resolvable:$true] %s1175
          %1178 = dma.vmem_to_hbm [thread:$0]  %s1176, 128, %s1173, %s1159
        $region84: #{tpu_custom_call.1} parent=59 // pred_fallthru
          _
      $region60: #{tpu_custom_call.1} parent=5 // pred_fallthru
        _
      %p1179 = scmp.le.s32.totalorder 2, %s24
      // Predicated region
      $region85: #{tpu_custom_call.1} parent=5 // pred_check
        %p1180 = pneg %p1179
      $region86: #{tpu_custom_call.1} parent=5 // pred_check_branch
        %1182 = sbr.rel (%p1180) target = $region88
      $region87: #{tpu_custom_call.1} parent=5 // pred_region
        %s1183 = ssub.s32 %s24, 2
        // Predicated region
        $region89: #{tpu_custom_call.1} parent=87 // pred_check
          %p1184 = pneg %p268
        $region90: #{tpu_custom_call.1} parent=87 // pred_check_branch
          %1186 = sbr.rel (%p1184) target = $region92
        $region91: #{tpu_custom_call.1} parent=87 // pred_region
          %p1187 = scmp.lt.s32.totalorder %s30, 1
          %s1188 = scalar_select %p1187, %s30, 1
          %s1189 = smul.addr %s1188, 8
          %s1190 = scalar_lea.vmem %s10, %s1189
        $region92: #{tpu_custom_call.1} parent=87 // pred_fallthru
          _
        // Predicated region
        $region93: #{tpu_custom_call.1} parent=87 // pred_check
          %p1191 = pneg %p294
        $region94: #{tpu_custom_call.1} parent=87 // pred_check_branch
          %1193 = sbr.rel (%p1191) target = $region96
        $region95: #{tpu_custom_call.1} parent=87 // pred_region
          %s1194 = sand.u32 %s279, 1
          %s1195 = scalar_lea.sflag [#allocation4], %s1194
          %s1196 = sand.u32 %s279, 1
          %s1197 = smul.addr %s1196, 8
          %s1198 = scalar_lea.vmem [#allocation10], %s1197
          %1199 = dma.done %s1195, 128
        $region96: #{tpu_custom_call.1} parent=87 // pred_fallthru
          _
      $region88: #{tpu_custom_call.1} parent=5 // pred_fallthru
        _
    $region6: #{tpu_custom_call.1} parent=1 // loop_footer
      %s28 = sadd.s32 1, %s24
    $region7: #{tpu_custom_call.1} parent=1 // loop_footer_branch
      %23 = sbr.rel target = $region3
    $region8: #{tpu_custom_call.1} parent=1 // loop_exit
      _
    %1200 = vsyncpa [#allocation3], 1
    %s1201 = scalar_lea.sflag [#allocation3], 1
    %1202 = vsyncpa %s1201, 1
    %1203 = vsyncpa [#allocation6], 1
    %1204 = vsyncpa [#allocation9], 1
    %1205 = vsyncpa [#allocation4], 1
    %s1206 = scalar_lea.sflag [#allocation4], 1
    %1207 = vsyncpa %s1206, 1

</llo_original>
